<compile_context>
chip_gen: v6e
topology: v6e:2x2x1
jax: 0.10.0
libtpu: 0.0.40
codegen_flags: <defaults>
</compile_context>

<pallas_src>
import jax
import jax.numpy as jnp
import numpy as np
from jax.experimental import pallas as pl
from jax.experimental.pallas import tpu as pltpu


# ----------------------------------------------------------------------------------
# Kernel
# ----------------------------------------------------------------------------------
def _encoder_layer_kernel(x_ref, maskb_ref,
                          wqkv_ref, wo_ref, bo_ref,
                          g1_ref, be1_ref,
                          w1_ref, b1_ref, w2_ref, b2_ref,
                          g2_ref, be2_ref,
                          out_ref):
    # One grid step == TB batch elements, activations flattened to (TB*S, D) rows.
    TB, _, S = maskb_ref.shape
    rows, D = x_ref.shape

    x2 = x_ref[...]                                   # (rows, D) f32
    x2_bf = x2.astype(jnp.bfloat16)

    # --- fused QKV projection: one MXU push, N = 3D lanes ---------------------------
    # torch divides scores by D**(1/4); that scale is pre-folded into the wq columns.
    qkv = jnp.dot(x2_bf, wqkv_ref[...], preferred_element_type=jnp.float32)  # (rows, 3D)
    q3 = qkv[:, 0:D].reshape(TB, S, D).astype(jnp.bfloat16)
    k3 = qkv[:, D:2 * D].reshape(TB, S, D).astype(jnp.bfloat16)
    v3 = qkv[:, 2 * D:3 * D].reshape(TB, S, D).astype(jnp.bfloat16)

    # --- attention scores: batched contraction of last dims (no k.T materialized) --
    # TODO(synk): for small TB*S, a single dense (rows x rows) matmul with a
    # block-diagonal mask may fill the MXU better than TB tiny einsums; measure first.
    scores = jnp.einsum("bqd,bkd->bqk", q3, k3,
                        preferred_element_type=jnp.float32)                  # (TB,S,S)
    scores = scores + maskb_ref[...]          # additive bias: -1e30 on padded keys

    # --- softmax over keys (f32, max-subtracted; approx reciprocal on the EUP) -----
    m = jnp.max(scores, axis=-1, keepdims=True)
    e = jnp.exp(scores - m)
    denom = jnp.sum(e, axis=-1, keepdims=True)
    attn_w = e * pl.reciprocal(denom, approx=True)
    # TODO(synk): for large S, tile over keys with an online-softmax (flash-style)
    # accumulator instead of materializing the full (TB, S, S) score matrix.

    attn = jnp.einsum("bqk,bkd->bqd", attn_w.astype(jnp.bfloat16), v3,
                      preferred_element_type=jnp.float32)                    # (TB,S,D)
    attn = attn.reshape(rows, D)
    attn = jnp.dot(attn.astype(jnp.bfloat16), wo_ref[...],
                   preferred_element_type=jnp.float32) + bo_ref[...]         # out_proj

    # --- residual + LayerNorm 1 (f32) -----------------------------------------------
    x1 = x2 + attn
    mu1 = jnp.mean(x1, axis=-1, keepdims=True)
    var1 = jnp.mean(jnp.square(x1 - mu1), axis=-1, keepdims=True)
    xn1 = (x1 - mu1) * jax.lax.rsqrt(var1 + 1e-5) * g1_ref[...] + be1_ref[...]

    # --- MLP: Linear(D, 2D) -> ReLU -> Linear(2D, D) --------------------------------
    # TODO(synk): at realistic D, stream w1/w2 over a K-tiled "arbitrary" grid axis
    # with a VMEM accumulator and/or single-buffer the constant weight blocks
    # (pipeline_mode=pl.Buffered(1)) to halve resident-weight VMEM on v7x.
    h = jnp.dot(xn1.astype(jnp.bfloat16), w1_ref[...],
                preferred_element_type=jnp.float32) + b1_ref[...]
    h = jnp.maximum(h, 0.0)
    z = jnp.dot(h.astype(jnp.bfloat16), w2_ref[...],
                preferred_element_type=jnp.float32) + b2_ref[...]

    # --- residual + LayerNorm 2 (f32) -----------------------------------------------
    x2r = xn1 + z
    mu2 = jnp.mean(x2r, axis=-1, keepdims=True)
    var2 = jnp.mean(jnp.square(x2r - mu2), axis=-1, keepdims=True)
    out = (x2r - mu2) * jax.lax.rsqrt(var2 + 1e-5) * g2_ref[...] + be2_ref[...]

    # TODO(synk): D=32 fills only 32/128 output lanes (fixed by the module). A
    # lane-dense (TB, S*D) out block would need an in-kernel relayout that crosses
    # (8,128) tiles; apply only after bundle-level verification that it pays off.
    out_ref[...] = out


# ----------------------------------------------------------------------------------
# Per-generation tiling policy
# ----------------------------------------------------------------------------------
def _tpu_defaults():
    """Generation-dependent knobs from the perf review."""
    try:
        kind = jax.devices()[0].device_kind.lower()
    except Exception:
        kind = ""
    if "v7" in kind or "tpu7" in kind:
        # 2 TensorCores / chip, 64 MiB VMEM per TC: two big grid steps, modest cap.
        return dict(num_tc=2, vmem_limit=48 * 1024 * 1024)
    if "v6" in kind or "v5e" in kind or "v5 lite" in kind:
        # Single TC, 128 MiB physical VMEM: maximize the block, raise the scoped cap.
        return dict(num_tc=1, vmem_limit=100 * 1024 * 1024)
    # Unknown / older generation: leave the compiler default VMEM limit alone.
    return dict(num_tc=1, vmem_limit=None)


def _choose_tb(batch, seq, d, *, num_tc, vmem_limit):
    """How many batch elements to fold per grid step.

    v5e/v6e (1 TC): pick the largest TB whose working set fits VMEM (grid=(1,) fine).
    v7x (2 TCs): prefer exactly one maximal block per TensorCore."""
    vmem = vmem_limit if vmem_limit is not None else 16 * 1024 * 1024

    def fits(t):
        rows = t * seq
        act = 4 * (4 * rows * d            # x + out (double-buffered by the pipeline)
                   + 10 * rows * d         # qkv / attn / residual / LN intermediates
                   + 4 * rows * 2 * d      # MLP hidden
                   + 3 * t * seq * seq)    # scores / exp / attn weights
        return act <= vmem // 2            # headroom for weights + compiler scratch

    divisors = [t for t in range(1, batch + 1) if batch % t == 0]
    # (tb*seq) must be a multiple of 8 unless the block spans the whole array.
    legal = [t for t in divisors if (t * seq) % 8 == 0 or batch // t == 1]
    ok = [t for t in legal if fits(t)] or legal or divisors

    if num_tc >= 2:
        per_core = [t for t in ok if batch // t == num_tc]
        if per_core:
            return max(per_core)
    return max(ok)


# ----------------------------------------------------------------------------------
# Parameter preparation (one-time): bf16 weights, fused QKV, score scale folded in.
# ----------------------------------------------------------------------------------
def prepare_params(raw):
    """raw: f32 params with weights already transposed so y = x @ W (+ b)."""
    D = raw["wq"].shape[0]
    scale = float(D) ** -0.25            # torch: scores / k.shape[-1]**(1/4)
    f32 = lambda a, shp: jnp.asarray(a, jnp.float32).reshape(shp)
    bf = lambda a: jnp.asarray(a, jnp.float32).astype(jnp.bfloat16)
    wqkv = jnp.concatenate([jnp.asarray(raw["wq"], jnp.float32) * scale,
                            jnp.asarray(raw["wk"], jnp.float32),
                            jnp.asarray(raw["wv"], jnp.float32)], axis=1)   # (D, 3D)
    return {
        "wqkv": wqkv.astype(jnp.bfloat16),
        "wo": bf(raw["wo"]),
        "bo": f32(raw["bo"], (1, D)),
        "g1": f32(raw["g1"], (1, D)), "be1": f32(raw["be1"], (1, D)),
        "w1": bf(raw["w1"]), "b1": f32(raw["b1"], (1, 2 * D)),
        "w2": bf(raw["w2"]), "b2": f32(raw["b2"], (1, D)),
        "g2": f32(raw["g2"], (1, D)), "be2": f32(raw["be2"], (1, D)),
    }


# ----------------------------------------------------------------------------------
# Wrappers
# ----------------------------------------------------------------------------------
def transformer_encoder_layer_bsd(x_bsd, mask_pad_bs, prep, *, tb=None):
    """Batch-major entry point (no HBM transposes).

    x_bsd: (B, S, D) float, mask_pad_bs: (B, S) bool (True = padded key),
    prep: output of prepare_params. Returns (B, S, D) float32."""
    B, S, D = x_bsd.shape
    hw = _tpu_defaults()
    if tb is None:
        tb = _choose_tb(B, S, D, num_tc=hw["num_tc"], vmem_limit=hw["vmem_limit"])
    assert B % tb == 0, f"tb={tb} must divide B={B}"
    if B // tb > 1 and (tb * S) % 8 != 0:
        tb = B                                   # fall back to one full block

    rows_blk = tb * S
    x_flat = x_bsd.astype(jnp.float32).reshape(B * S, D)
    # Finite additive mask bias (avoids NaN when a query row has all keys padded).
    mask_bias = jnp.where(mask_pad_bs, -1e30, 0.0).astype(jnp.float32)[:, None, :]  # (B,1,S)

    def rep(shape):  # weight / bias block: whole array, same block every grid step
        n = len(shape)
        return pl.BlockSpec(shape, lambda b, _n=n: (0,) * _n)

    out = pl.pallas_call(
        _encoder_layer_kernel,
        out_shape=jax.ShapeDtypeStruct((B * S, D), jnp.float32),
        grid=(B // tb,),
        in_specs=[
            pl.BlockSpec((rows_blk, D), lambda b: (b, 0)),   # x  (flattened rows)
            pl.BlockSpec((tb, 1, S), lambda b: (b, 0, 0)),   # mask bias
            rep((D, 3 * D)),       # fused wqkv (bf16, scale folded into wq cols)
            rep((D, D)),           # wo (bf16)
            rep((1, D)),           # bo
            rep((1, D)),           # ln1 gamma
            rep((1, D)),           # ln1 beta
            rep((D, 2 * D)),       # mlp w1 (bf16)
            rep((1, 2 * D)),       # mlp b1
            rep((2 * D, D)),       # mlp w2 (bf16)
            rep((1, D)),           # mlp b2
            rep((1, D)),           # ln2 gamma
            rep((1, D)),           # ln2 beta
        ],
        out_specs=pl.BlockSpec((rows_blk, D), lambda b: (b, 0)),
        compiler_params=pltpu.CompilerParams(
            dimension_semantics=("parallel",),
            vmem_limit_bytes=hw["vmem_limit"],
        ),
    )(x_flat, mask_bias,
      prep["wqkv"], prep["wo"], prep["bo"],
      prep["g1"], prep["be1"],
      prep["w1"], prep["b1"], prep["w2"], prep["b2"],
      prep["g2"], prep["be2"])
    return out.reshape(B, S, D)


def transformer_encoder_layer(x_sbd, mask_pad_sb, prep, **kw):
    """PyTorch-convention shim: x (S, B, D), mask_pad (S, B) -> (S, B, D).

    Prefer transformer_encoder_layer_bsd upstream: this shim adds two full HBM
    transposes of the activations that the batch-major path avoids."""
    x_bsd = jnp.transpose(x_sbd, (1, 0, 2))
    mask_bs = jnp.transpose(mask_pad_sb, (1, 0))
    out = transformer_encoder_layer_bsd(x_bsd, mask_bs, prep, **kw)
    return jnp.transpose(out, (1, 0, 2))


# ----------------------------------------------------------------------------------
# Pure-JAX reference + params
# ----------------------------------------------------------------------------------
def _reference_bsd(x_bsd, mask_pad_bs, p):
    """Mirror of the PyTorch forward (eval mode), batch-major, with the same
    bf16-matmul / f32-accumulate mixed precision (and the same scale-into-wq fold)
    as the kernel.  torch's `scores / d**(1/4)` is applied by scaling wq."""
    bf16 = jnp.bfloat16
    B, S, D = x_bsd.shape
    x = x_bsd.astype(jnp.float32)

    def mm(a, w):
        return jnp.dot(a.astype(bf16), w.astype(bf16), preferred_element_type=jnp.float32)

    q = mm(x, p["wq"] * (D ** -0.25))
    k = mm(x, p["wk"])
    v = mm(x, p["wv"])
    scores = jnp.einsum("bqd,bkd->bqk", q.astype(bf16), k.astype(bf16),
                        preferred_element_type=jnp.float32)
    scores = scores + jnp.where(mask_pad_bs[:, None, :], -1e30, 0.0).astype(jnp.float32)
    w = jax.nn.softmax(scores, axis=-1)
    attn = jnp.einsum("bqk,bkd->bqd", w.astype(bf16), v.astype(bf16),
                      preferred_element_type=jnp.float32)
    attn = mm(attn, p["wo"]) + p["bo"]

    def ln(y, g, b):
        mu = jnp.mean(y, axis=-1, keepdims=True)
        var = jnp.mean((y - mu) ** 2, axis=-1, keepdims=True)
        return (y - mu) / jnp.sqrt(var + 1e-5) * g + b

    x1 = ln(x + attn, p["g1"], p["be1"])
    h = jnp.maximum(mm(x1, p["w1"]) + p["b1"], 0.0)
    z = mm(h, p["w2"]) + p["b2"]
    return ln(x1 + z, p["g2"], p["be2"])


def _init_params(key, D):
    ks = jax.random.split(key, 8)
    scale = 0.1
    # nn.Linear weights are stored here already transposed: y = x @ W (+ b)
    return {
        "wq": jax.random.normal(ks[0], (D, D), jnp.float32) * scale,
        "wk": jax.random.normal(ks[1], (D, D), jnp.float32) * scale,
        "wv": jax.random.normal(ks[2], (D, D), jnp.float32) * scale,
        "wo": jax.random.normal(ks[3], (D, D), jnp.float32) * scale,
        "bo": jax.random.normal(ks[4], (1, D), jnp.float32) * scale,
        "w1": jax.random.normal(ks[5], (D, 2 * D), jnp.float32) * scale,
        "b1": jax.random.normal(ks[6], (1, 2 * D), jnp.float32) * scale,
        "w2": jax.random.normal(ks[7], (2 * D, D), jnp.float32) * scale,
        "b2": jnp.zeros((1, D), jnp.float32),
        "g1": jnp.ones((1, D), jnp.float32),
        "be1": jnp.zeros((1, D), jnp.float32),
        "g2": jnp.ones((1, D), jnp.float32),
        "be2": jnp.zeros((1, D), jnp.float32),
    }


if __name__ == "__main__":
    S, B, D = 8, 4, 32
    key = jax.random.PRNGKey(0)
    kx, kp = jax.random.split(key)

    # PyTorch convention: x (seq, batch, dim), mask_pad (seq, batch), True = padded.
    x_sbd = jax.random.normal(kx, (S, B, D), jnp.float32)
    mask_np = np.zeros((S, B), dtype=bool)
    mask_np[-2:, 0] = True     # batch 0: last 2 positions padded
    mask_np[-1:, 1] = True     # batch 1: last position padded
    mask_np[-3:, 3] = True     # batch 3: last 3 positions padded
    mask_pad = jnp.asarray(mask_np)

    raw_params = _init_params(kp, D)
    prep = prepare_params(raw_params)      # one-time: bf16 + fused QKV + folded scale

    # Recommended transpose-free path (batch-major activations).
    x_bsd = jnp.transpose(x_sbd, (1, 0, 2))
    mask_bs = jnp.transpose(mask_pad, (1, 0))
    out_bsd = jax.block_until_ready(transformer_encoder_layer_bsd(x_bsd, mask_bs, prep))

    ref_bsd = _reference_bsd(x_bsd, mask_bs, raw_params)
    # Loose-ish tolerance: bf16 MXU operands + approx reciprocal in the softmax.
    np.testing.assert_allclose(np.asarray(out_bsd), np.asarray(ref_bsd),
                               rtol=2e-2, atol=2e-2)

    # PyTorch-convention shim (same kernel underneath, plus the two HBM transposes).
    out_sbd = jax.block_until_ready(transformer_encoder_layer(x_sbd, mask_pad, prep))
    np.testing.assert_allclose(np.asarray(out_sbd),
                               np.asarray(jnp.transpose(out_bsd, (1, 0, 2))),
                               rtol=1e-6, atol=1e-6)

    # TODO(synk): dropout layers are treated as identity (eval mode); training-mode
    # stochastic dropout would need pltpu.prng_* inside the kernel.
    print("KERNEL_OK")
</pallas_src>

<mosaic_0001>
module attributes {stable_mosaic.version = 11 : i64} {
  func.func @_encoder_layer_kernel(%arg0: i32, %arg1: memref<32x32xf32, #tpu.memory_space<vmem>>, %arg2: memref<4x1x8xf32, #tpu.memory_space<vmem>>, %arg3: memref<32x96xbf16, #tpu.memory_space<vmem>>, %arg4: memref<32x32xbf16, #tpu.memory_space<vmem>>, %arg5: memref<1x32xf32, #tpu.memory_space<vmem>>, %arg6: memref<1x32xf32, #tpu.memory_space<vmem>>, %arg7: memref<1x32xf32, #tpu.memory_space<vmem>>, %arg8: memref<32x64xbf16, #tpu.memory_space<vmem>>, %arg9: memref<1x64xf32, #tpu.memory_space<vmem>>, %arg10: memref<64x32xbf16, #tpu.memory_space<vmem>>, %arg11: memref<1x32xf32, #tpu.memory_space<vmem>>, %arg12: memref<1x32xf32, #tpu.memory_space<vmem>>, %arg13: memref<1x32xf32, #tpu.memory_space<vmem>>, %arg14: memref<32x32xf32, #tpu.memory_space<vmem>>) attributes {dimension_semantics = [#tpu.dimension_semantics<parallel>], iteration_bounds = array<i64: 1>, scalar_prefetch = 0 : i64, scratch_operands = 0 : i64, tpu.core_type = #tpu.core_type<tc>, window_params = [{transform_indices = @transform_0, window_bounds = array<i64: 32, 32>}, {transform_indices = @transform_1, window_bounds = array<i64: 4, 1, 8>}, {pipeline_mode = #tpu.pipeline_mode<synchronous>, transform_indices = @transform_2, window_bounds = array<i64: 32, 96>}, {pipeline_mode = #tpu.pipeline_mode<synchronous>, transform_indices = @transform_3, window_bounds = array<i64: 32, 32>}, {pipeline_mode = #tpu.pipeline_mode<synchronous>, transform_indices = @transform_4, window_bounds = array<i64: 1, 32>}, {pipeline_mode = #tpu.pipeline_mode<synchronous>, transform_indices = @transform_5, window_bounds = array<i64: 1, 32>}, {pipeline_mode = #tpu.pipeline_mode<synchronous>, transform_indices = @transform_6, window_bounds = array<i64: 1, 32>}, {pipeline_mode = #tpu.pipeline_mode<synchronous>, transform_indices = @transform_7, window_bounds = array<i64: 32, 64>}, {pipeline_mode = #tpu.pipeline_mode<synchronous>, transform_indices = @transform_8, window_bounds = array<i64: 1, 64>}, {pipeline_mode = #tpu.pipeline_mode<synchronous>, transform_indices = @transform_9, window_bounds = array<i64: 64, 32>}, {pipeline_mode = #tpu.pipeline_mode<synchronous>, transform_indices = @transform_10, window_bounds = array<i64: 1, 32>}, {pipeline_mode = #tpu.pipeline_mode<synchronous>, transform_indices = @transform_11, window_bounds = array<i64: 1, 32>}, {pipeline_mode = #tpu.pipeline_mode<synchronous>, transform_indices = @transform_12, window_bounds = array<i64: 1, 32>}, {transform_indices = @transform_13, window_bounds = array<i64: 32, 32>}]} {
    %c0 = arith.constant 0 : index
    %c0_0 = arith.constant 0 : index
    %0 = vector.load %arg1[%c0, %c0_0] : memref<32x32xf32, #tpu.memory_space<vmem>>, vector<32x32xf32>
    %1 = arith.truncf %0 : vector<32x32xf32> to vector<32x32xbf16>
    %c0_1 = arith.constant 0 : index
    %c0_2 = arith.constant 0 : index
    %2 = vector.load %arg3[%c0_1, %c0_2] : memref<32x96xbf16, #tpu.memory_space<vmem>>, vector<32x96xbf16>
    %cst = arith.constant dense<0.000000e+00> : vector<32x96xf32>
    %3 = tpu.matmul %1, %2, %cst {dimension_numbers = #tpu.dot_dimension_numbers<[1], [0], [0], [1], [0, 0, 1, 1], [], []>} : vector<32x32xbf16>, vector<32x96xbf16>, vector<32x96xf32> -> vector<32x96xf32>
    %4 = vector.extract_strided_slice %3 {offsets = [0, 0], sizes = [32, 32], strides = [1, 1]} : vector<32x96xf32> to vector<32x32xf32>
    %5 = vector.shape_cast %4 : vector<32x32xf32> to vector<4x8x32xf32>
    %6 = arith.truncf %5 : vector<4x8x32xf32> to vector<4x8x32xbf16>
    %7 = vector.extract_strided_slice %3 {offsets = [0, 32], sizes = [32, 32], strides = [1, 1]} : vector<32x96xf32> to vector<32x32xf32>
    %8 = vector.shape_cast %7 : vector<32x32xf32> to vector<4x8x32xf32>
    %9 = arith.truncf %8 : vector<4x8x32xf32> to vector<4x8x32xbf16>
    %10 = vector.extract_strided_slice %3 {offsets = [0, 64], sizes = [32, 32], strides = [1, 1]} : vector<32x96xf32> to vector<32x32xf32>
    %11 = vector.shape_cast %10 : vector<32x32xf32> to vector<4x8x32xf32>
    %12 = arith.truncf %11 : vector<4x8x32xf32> to vector<4x8x32xbf16>
    "tpu.trace_start"() <{level = 10 : i32, message = "bqd,bkd->bqk"}> : () -> ()
    %cst_3 = arith.constant dense<0.000000e+00> : vector<4x8x8xf32>
    %13 = tpu.matmul %6, %9, %cst_3 {dimension_numbers = #tpu.dot_dimension_numbers<[2], [2], [1], [1], [0, 0, 0, 1, 1, 1], [0], [0]>} : vector<4x8x32xbf16>, vector<4x8x32xbf16>, vector<4x8x8xf32> -> vector<4x8x8xf32>
    "tpu.trace_stop"() : () -> ()
    %c0_4 = arith.constant 0 : index
    %c0_5 = arith.constant 0 : index
    %c0_6 = arith.constant 0 : index
    %14 = vector.load %arg2[%c0_4, %c0_5, %c0_6] : memref<4x1x8xf32, #tpu.memory_space<vmem>>, vector<4x1x8xf32>
    %15 = vector.broadcast %14 : vector<4x1x8xf32> to vector<4x8x8xf32>
    %16 = arith.addf %13, %15 : vector<4x8x8xf32>
    %cst_7 = arith.constant dense<0xFF800000> : vector<4x8xf32>
    %17 = vector.multi_reduction <maximumf>, %16, %cst_7 [2] : vector<4x8x8xf32> to vector<4x8xf32>
    %18 = vector.shape_cast %17 : vector<4x8xf32> to vector<4x8x1xf32>
    %19 = vector.broadcast %18 : vector<4x8x1xf32> to vector<4x8x8xf32>
    %20 = arith.subf %16, %19 : vector<4x8x8xf32>
    %21 = math.exp %20 : vector<4x8x8xf32>
    %cst_8 = arith.constant dense<0.000000e+00> : vector<4x8xf32>
    %22 = vector.multi_reduction <add>, %21, %cst_8 [2] : vector<4x8x8xf32> to vector<4x8xf32>
    %23 = vector.shape_cast %22 : vector<4x8xf32> to vector<4x8x1xf32>
    %24 = tpu.reciprocal %23 {approx = true} : vector<4x8x1xf32> -> vector<4x8x1xf32>
    %25 = vector.broadcast %24 : vector<4x8x1xf32> to vector<4x8x8xf32>
    %26 = arith.mulf %21, %25 : vector<4x8x8xf32>
    %27 = arith.truncf %26 : vector<4x8x8xf32> to vector<4x8x8xbf16>
    "tpu.trace_start"() <{level = 10 : i32, message = "bqk,bkd->bqd"}> : () -> ()
    %cst_9 = arith.constant dense<0.000000e+00> : vector<4x8x32xf32>
    %28 = tpu.matmul %27, %12, %cst_9 {dimension_numbers = #tpu.dot_dimension_numbers<[2], [1], [1], [2], [0, 0, 0, 1, 1, 2], [0], [0]>} : vector<4x8x8xbf16>, vector<4x8x32xbf16>, vector<4x8x32xf32> -> vector<4x8x32xf32>
    "tpu.trace_stop"() : () -> ()
    %29 = vector.shape_cast %28 : vector<4x8x32xf32> to vector<32x32xf32>
    %30 = arith.truncf %29 : vector<32x32xf32> to vector<32x32xbf16>
    %c0_10 = arith.constant 0 : index
    %c0_11 = arith.constant 0 : index
    %31 = vector.load %arg4[%c0_10, %c0_11] : memref<32x32xbf16, #tpu.memory_space<vmem>>, vector<32x32xbf16>
    %cst_12 = arith.constant dense<0.000000e+00> : vector<32x32xf32>
    %32 = tpu.matmul %30, %31, %cst_12 {dimension_numbers = #tpu.dot_dimension_numbers<[1], [0], [0], [1], [0, 0, 1, 1], [], []>} : vector<32x32xbf16>, vector<32x32xbf16>, vector<32x32xf32> -> vector<32x32xf32>
    %c0_13 = arith.constant 0 : index
    %c0_14 = arith.constant 0 : index
    %33 = vector.load %arg5[%c0_13, %c0_14] : memref<1x32xf32, #tpu.memory_space<vmem>>, vector<1x32xf32>
    %34 = vector.broadcast %33 : vector<1x32xf32> to vector<32x32xf32>
    %35 = arith.addf %32, %34 : vector<32x32xf32>
    %36 = arith.addf %0, %35 : vector<32x32xf32>
    %cst_15 = arith.constant dense<0.000000e+00> : vector<32xf32>
    %37 = vector.multi_reduction <add>, %36, %cst_15 [1] : vector<32x32xf32> to vector<32xf32>
    %38 = vector.shape_cast %37 : vector<32xf32> to vector<32x1xf32>
    %cst_16 = arith.constant 3.200000e+01 : f32
    %39 = vector.broadcast %cst_16 : f32 to vector<32x1xf32>
    %40 = arith.divf %38, %39 : vector<32x1xf32>
    %41 = vector.broadcast %40 : vector<32x1xf32> to vector<32x32xf32>
    %42 = arith.subf %36, %41 : vector<32x32xf32>
    %43 = arith.mulf %42, %42 : vector<32x32xf32>
    %cst_17 = arith.constant dense<0.000000e+00> : vector<32xf32>
    %44 = vector.multi_reduction <add>, %43, %cst_17 [1] : vector<32x32xf32> to vector<32xf32>
    %45 = vector.shape_cast %44 : vector<32xf32> to vector<32x1xf32>
    %cst_18 = arith.constant 3.200000e+01 : f32
    %46 = vector.broadcast %cst_18 : f32 to vector<32x1xf32>
    %47 = arith.divf %45, %46 : vector<32x1xf32>
    %48 = vector.broadcast %40 : vector<32x1xf32> to vector<32x32xf32>
    %49 = arith.subf %36, %48 : vector<32x32xf32>
    %cst_19 = arith.constant 9.99999974E-6 : f32
    %50 = vector.broadcast %cst_19 : f32 to vector<32x1xf32>
    %51 = arith.addf %47, %50 : vector<32x1xf32>
    %52 = math.rsqrt %51 : vector<32x1xf32>
    %53 = vector.broadcast %52 : vector<32x1xf32> to vector<32x32xf32>
    %54 = arith.mulf %49, %53 : vector<32x32xf32>
    %c0_20 = arith.constant 0 : index
    %c0_21 = arith.constant 0 : index
    %55 = vector.load %arg6[%c0_20, %c0_21] : memref<1x32xf32, #tpu.memory_space<vmem>>, vector<1x32xf32>
    %56 = vector.broadcast %55 : vector<1x32xf32> to vector<32x32xf32>
    %57 = arith.mulf %54, %56 : vector<32x32xf32>
    %c0_22 = arith.constant 0 : index
    %c0_23 = arith.constant 0 : index
    %58 = vector.load %arg7[%c0_22, %c0_23] : memref<1x32xf32, #tpu.memory_space<vmem>>, vector<1x32xf32>
    %59 = vector.broadcast %58 : vector<1x32xf32> to vector<32x32xf32>
    %60 = arith.addf %57, %59 : vector<32x32xf32>
    %61 = arith.truncf %60 : vector<32x32xf32> to vector<32x32xbf16>
    %c0_24 = arith.constant 0 : index
    %c0_25 = arith.constant 0 : index
    %62 = vector.load %arg8[%c0_24, %c0_25] : memref<32x64xbf16, #tpu.memory_space<vmem>>, vector<32x64xbf16>
    %cst_26 = arith.constant dense<0.000000e+00> : vector<32x64xf32>
    %63 = tpu.matmul %61, %62, %cst_26 {dimension_numbers = #tpu.dot_dimension_numbers<[1], [0], [0], [1], [0, 0, 1, 1], [], []>} : vector<32x32xbf16>, vector<32x64xbf16>, vector<32x64xf32> -> vector<32x64xf32>
    %c0_27 = arith.constant 0 : index
    %c0_28 = arith.constant 0 : index
    %64 = vector.load %arg9[%c0_27, %c0_28] : memref<1x64xf32, #tpu.memory_space<vmem>>, vector<1x64xf32>
    %65 = vector.broadcast %64 : vector<1x64xf32> to vector<32x64xf32>
    %66 = arith.addf %63, %65 : vector<32x64xf32>
    %cst_29 = arith.constant 0.000000e+00 : f32
    %67 = vector.broadcast %cst_29 : f32 to vector<32x64xf32>
    %68 = arith.maximumf %66, %67 : vector<32x64xf32>
    %69 = arith.truncf %68 : vector<32x64xf32> to vector<32x64xbf16>
    %c0_30 = arith.constant 0 : index
    %c0_31 = arith.constant 0 : index
    %70 = vector.load %arg10[%c0_30, %c0_31] : memref<64x32xbf16, #tpu.memory_space<vmem>>, vector<64x32xbf16>
    %cst_32 = arith.constant dense<0.000000e+00> : vector<32x32xf32>
    %71 = tpu.matmul %69, %70, %cst_32 {dimension_numbers = #tpu.dot_dimension_numbers<[1], [0], [0], [1], [0, 0, 1, 1], [], []>} : vector<32x64xbf16>, vector<64x32xbf16>, vector<32x32xf32> -> vector<32x32xf32>
    %c0_33 = arith.constant 0 : index
    %c0_34 = arith.constant 0 : index
    %72 = vector.load %arg11[%c0_33, %c0_34] : memref<1x32xf32, #tpu.memory_space<vmem>>, vector<1x32xf32>
    %73 = vector.broadcast %72 : vector<1x32xf32> to vector<32x32xf32>
    %74 = arith.addf %71, %73 : vector<32x32xf32>
    %75 = arith.addf %60, %74 : vector<32x32xf32>
    %cst_35 = arith.constant dense<0.000000e+00> : vector<32xf32>
    %76 = vector.multi_reduction <add>, %75, %cst_35 [1] : vector<32x32xf32> to vector<32xf32>
    %77 = vector.shape_cast %76 : vector<32xf32> to vector<32x1xf32>
    %cst_36 = arith.constant 3.200000e+01 : f32
    %78 = vector.broadcast %cst_36 : f32 to vector<32x1xf32>
    %79 = arith.divf %77, %78 : vector<32x1xf32>
    %80 = vector.broadcast %79 : vector<32x1xf32> to vector<32x32xf32>
    %81 = arith.subf %75, %80 : vector<32x32xf32>
    %82 = arith.mulf %81, %81 : vector<32x32xf32>
    %cst_37 = arith.constant dense<0.000000e+00> : vector<32xf32>
    %83 = vector.multi_reduction <add>, %82, %cst_37 [1] : vector<32x32xf32> to vector<32xf32>
    %84 = vector.shape_cast %83 : vector<32xf32> to vector<32x1xf32>
    %cst_38 = arith.constant 3.200000e+01 : f32
    %85 = vector.broadcast %cst_38 : f32 to vector<32x1xf32>
    %86 = arith.divf %84, %85 : vector<32x1xf32>
    %87 = vector.broadcast %79 : vector<32x1xf32> to vector<32x32xf32>
    %88 = arith.subf %75, %87 : vector<32x32xf32>
    %cst_39 = arith.constant 9.99999974E-6 : f32
    %89 = vector.broadcast %cst_39 : f32 to vector<32x1xf32>
    %90 = arith.addf %86, %89 : vector<32x1xf32>
    %91 = math.rsqrt %90 : vector<32x1xf32>
    %92 = vector.broadcast %91 : vector<32x1xf32> to vector<32x32xf32>
    %93 = arith.mulf %88, %92 : vector<32x32xf32>
    %c0_40 = arith.constant 0 : index
    %c0_41 = arith.constant 0 : index
    %94 = vector.load %arg12[%c0_40, %c0_41] : memref<1x32xf32, #tpu.memory_space<vmem>>, vector<1x32xf32>
    %95 = vector.broadcast %94 : vector<1x32xf32> to vector<32x32xf32>
    %96 = arith.mulf %93, %95 : vector<32x32xf32>
    %c0_42 = arith.constant 0 : index
    %c0_43 = arith.constant 0 : index
    %97 = vector.load %arg13[%c0_42, %c0_43] : memref<1x32xf32, #tpu.memory_space<vmem>>, vector<1x32xf32>
    %98 = vector.broadcast %97 : vector<1x32xf32> to vector<32x32xf32>
    %99 = arith.addf %96, %98 : vector<32x32xf32>
    %c0_44 = arith.constant 0 : index
    %c0_45 = arith.constant 0 : index
    %100 = vector.load %arg14[%c0_44, %c0_45] : memref<32x32xf32, #tpu.memory_space<vmem>>, vector<32x32xf32>
    tpu.vector_store %arg14[%c0_44, %c0_45], %99 {strides = array<i32>} : memref<32x32xf32, #tpu.memory_space<vmem>>, vector<32x32xf32>,
    return
  }
  func.func @transform_0(%arg0: i32) -> (i32, i32) {
    %c0_i32 = arith.constant 0 : i32
    %c0_i32_0 = arith.constant 0 : i32
    return %arg0, %c0_i32 : i32, i32
  }
  func.func @transform_1(%arg0: i32) -> (i32, i32, i32) {
    %c0_i32 = arith.constant 0 : i32
    %c0_i32_0 = arith.constant 0 : i32
    %c0_i32_1 = arith.constant 0 : i32
    return %arg0, %c0_i32, %c0_i32_0 : i32, i32, i32
  }
  func.func @transform_2(%arg0: i32) -> (i32, i32) {
    %c0_i32 = arith.constant 0 : i32
    %c0_i32_0 = arith.constant 0 : i32
    %c0_i32_1 = arith.constant 0 : i32
    return %c0_i32, %c0_i32_0 : i32, i32
  }
  func.func @transform_3(%arg0: i32) -> (i32, i32) {
    %c0_i32 = arith.constant 0 : i32
    %c0_i32_0 = arith.constant 0 : i32
    %c0_i32_1 = arith.constant 0 : i32
    return %c0_i32, %c0_i32_0 : i32, i32
  }
  func.func @transform_4(%arg0: i32) -> (i32, i32) {
    %c0_i32 = arith.constant 0 : i32
    %c0_i32_0 = arith.constant 0 : i32
    %c0_i32_1 = arith.constant 0 : i32
    return %c0_i32, %c0_i32_0 : i32, i32
  }
  func.func @transform_5(%arg0: i32) -> (i32, i32) {
    %c0_i32 = arith.constant 0 : i32
    %c0_i32_0 = arith.constant 0 : i32
    %c0_i32_1 = arith.constant 0 : i32
    return %c0_i32, %c0_i32_0 : i32, i32
  }
  func.func @transform_6(%arg0: i32) -> (i32, i32) {
    %c0_i32 = arith.constant 0 : i32
    %c0_i32_0 = arith.constant 0 : i32
    %c0_i32_1 = arith.constant 0 : i32
    return %c0_i32, %c0_i32_0 : i32, i32
  }
  func.func @transform_7(%arg0: i32) -> (i32, i32) {
    %c0_i32 = arith.constant 0 : i32
    %c0_i32_0 = arith.constant 0 : i32
    %c0_i32_1 = arith.constant 0 : i32
    return %c0_i32, %c0_i32_0 : i32, i32
  }
  func.func @transform_8(%arg0: i32) -> (i32, i32) {
    %c0_i32 = arith.constant 0 : i32
    %c0_i32_0 = arith.constant 0 : i32
    %c0_i32_1 = arith.constant 0 : i32
    return %c0_i32, %c0_i32_0 : i32, i32
  }
  func.func @transform_9(%arg0: i32) -> (i32, i32) {
    %c0_i32 = arith.constant 0 : i32
    %c0_i32_0 = arith.constant 0 : i32
    %c0_i32_1 = arith.constant 0 : i32
    return %c0_i32, %c0_i32_0 : i32, i32
  }
  func.func @transform_10(%arg0: i32) -> (i32, i32) {
    %c0_i32 = arith.constant 0 : i32
    %c0_i32_0 = arith.constant 0 : i32
    %c0_i32_1 = arith.constant 0 : i32
    return %c0_i32, %c0_i32_0 : i32, i32
  }
  func.func @transform_11(%arg0: i32) -> (i32, i32) {
    %c0_i32 = arith.constant 0 : i32
    %c0_i32_0 = arith.constant 0 : i32
    %c0_i32_1 = arith.constant 0 : i32
    return %c0_i32, %c0_i32_0 : i32, i32
  }
  func.func @transform_12(%arg0: i32) -> (i32, i32) {
    %c0_i32 = arith.constant 0 : i32
    %c0_i32_0 = arith.constant 0 : i32
    %c0_i32_1 = arith.constant 0 : i32
    return %c0_i32, %c0_i32_0 : i32, i32
  }
  func.func @transform_13(%arg0: i32) -> (i32, i32) {
    %c0_i32 = arith.constant 0 : i32
    %c0_i32_0 = arith.constant 0 : i32
    return %arg0, %c0_i32 : i32, i32
  }
}

</mosaic_0001>

<llo_original>
// kernel: tpu_custom_call.1
$region0: #{tpu_custom_call.1}
  #allocation0 [shape = 'u32[]', space=smem, size = 0x4, offset = 0x4, fixed_abs, tag = 'smem constant byte address 0x4 - core index']
  #allocation1 [shape = 'u32[144,128]{1,0:T(1,128)}', space=vmem, size = 0x12000, scoped, tag = 'internal scratch']
  %s0 = inlined_call_operand.vmem [shape: f32[32,32], index: 0, kind: input, shape index: {}]
  %s1 = inlined_call_operand.hbm [shape: f32[4,1,8], index: 1, kind: input, shape index: {}]
  %s2 = inlined_call_operand.vmem [shape: bf16[32,96], index: 2, kind: input, shape index: {}]
  %s3 = inlined_call_operand.hbm [shape: bf16[32,32], index: 3, kind: input, shape index: {}]
  %s4 = inlined_call_operand.hbm [shape: f32[1,32], index: 4, kind: input, shape index: {}]
  %s5 = inlined_call_operand.hbm [shape: f32[1,32], index: 5, kind: input, shape index: {}]
  %s6 = inlined_call_operand.hbm [shape: f32[1,32], index: 6, kind: input, shape index: {}]
  %s7 = inlined_call_operand.hbm [shape: bf16[32,64], index: 7, kind: input, shape index: {}]
  %s8 = inlined_call_operand.hbm [shape: f32[1,64], index: 8, kind: input, shape index: {}]
  %s9 = inlined_call_operand.vmem [shape: bf16[64,32], index: 9, kind: input, shape index: {}]
  %s10 = inlined_call_operand.vmem [shape: f32[1,32], index: 10, kind: input, shape index: {}]
  %s11 = inlined_call_operand.vmem [shape: f32[1,32], index: 11, kind: input, shape index: {}]
  %s12 = inlined_call_operand.vmem [shape: f32[1,32], index: 12, kind: input, shape index: {}]
  %s13 = inlined_call_operand.hbm [shape: f32[32,32], index: 13, kind: output, shape index: {}]
  %s14 = sld [smem:[#allocation0]]
  $region90: #{tpu_custom_call.1} parent=0
    _
  %s16 = ssub.s32 1, %s14
  %s17 = scalar_select 0, %s16, %s14
  $region1: #{tpu_custom_call.1} parent=0
    #allocation2 [shape = 'u8[2048]{0}', space=vmem, size = 0x800, scoped, tag = 'input window, operand 1, single buffered']
    #allocation3 [shape = 's32[1]{0}', space=sflag, size = 0x4, scoped, tag = 'scoped memory for tpu_custom_call.1']
    #allocation4 [shape = 's32[1]{0}', space=sflag, size = 0x4, scoped, tag = 'scoped memory for tpu_custom_call.1']
    #allocation5 [shape = 'u8[8192]{0}', space=vmem, size = 0x2000, scoped, tag = 'input window, operand 3, single buffered']
    #allocation6 [shape = 's32[1]{0}', space=sflag, size = 0x4, scoped, tag = 'scoped memory for tpu_custom_call.1']
    #allocation7 [shape = 'u8[512]{0}', space=vmem, size = 0x400, scoped, tag = 'input window, operand 4, single buffered']
    #allocation8 [shape = 'u8[512]{0}', space=vmem, size = 0x400, scoped, tag = 'input window, operand 5, single buffered']
    #allocation9 [shape = 's32[1]{0}', space=sflag, size = 0x4, scoped, tag = 'scoped memory for tpu_custom_call.1']
    #allocation10 [shape = 'u8[512]{0}', space=vmem, size = 0x400, scoped, tag = 'input window, operand 6, single buffered']
    #allocation11 [shape = 'u8[8192]{0}', space=vmem, size = 0x2000, scoped, tag = 'input window, operand 7, single buffered']
    #allocation12 [shape = 's32[1]{0}', space=sflag, size = 0x4, scoped, tag = 'scoped memory for tpu_custom_call.1']
    #allocation13 [shape = 'u8[512]{0}', space=vmem, size = 0x400, scoped, tag = 'input window, operand 8, single buffered']
    #allocation14 [shape = 'u8[16384]{0}', space=vmem, size = 0x4000, scoped, tag = 'output window, operand 0, single buffered']
    %18 = vsyncpa [#allocation3], 0
    %19 = vsyncpa [#allocation6], 0
    %20 = vsyncpa [#allocation9], 0
    %21 = vsyncpa [#allocation12], 0
    %22 = vsyncpa [#allocation4], 0
    // Predicated region
    $region2: #{tpu_custom_call.1} parent=1 // pred_check
      _
    $region3: #{tpu_custom_call.1} parent=1 // pred_check_branch
      %24 = sbr.rel (0) target = $region5
    $region4: #{tpu_custom_call.1} parent=1 // pred_region
      _
    $region5: #{tpu_custom_call.1} parent=1 // pred_fallthru
      _
    // Predicated region
    $region6: #{tpu_custom_call.1} parent=1 // pred_check
      _
    $region7: #{tpu_custom_call.1} parent=1 // pred_check_branch
      %26 = sbr.rel (0) target = $region9
    $region8: #{tpu_custom_call.1} parent=1 // pred_region
      %s28 = ssub.s32 64, 64
      %29 = vsyncadd [#allocation3], %s28
      %s30 = sshll.u32 [#allocation2], 4
      %s31 = int_to_ptr.vmem [resolvable:$true] %s30
      %36 = dma.hbm_to_vmem [thread:$0]  %s1, 64, %s31, [#allocation3], 16, 16, 1
    $region9: #{tpu_custom_call.1} parent=1 // pred_fallthru
      _
    // Predicated region
    $region10: #{tpu_custom_call.1} parent=1 // pred_check
      _
    $region11: #{tpu_custom_call.1} parent=1 // pred_check_branch
      %38 = sbr.rel (0) target = $region13
    $region12: #{tpu_custom_call.1} parent=1 // pred_region
      _
    $region13: #{tpu_custom_call.1} parent=1 // pred_fallthru
      _
    // Predicated region
    $region14: #{tpu_custom_call.1} parent=1 // pred_check
      _
    $region15: #{tpu_custom_call.1} parent=1 // pred_check_branch
      %40 = sbr.rel (0) target = $region17
    $region16: #{tpu_custom_call.1} parent=1 // pred_region
      %s42 = ssub.s32 256, 256
      %43 = vsyncadd [#allocation6], %s42
      %s44 = sshll.u32 [#allocation5], 4
      %s45 = int_to_ptr.vmem [resolvable:$true] %s44
      %50 = dma.hbm_to_vmem [thread:$0]  %s3, 256, %s45, [#allocation6], 64, 64, 4
    $region17: #{tpu_custom_call.1} parent=1 // pred_fallthru
      _
    // Predicated region
    $region18: #{tpu_custom_call.1} parent=1 // pred_check
      _
    $region19: #{tpu_custom_call.1} parent=1 // pred_check_branch
      %52 = sbr.rel (0) target = $region21
    $region20: #{tpu_custom_call.1} parent=1 // pred_region
      %s54 = ssub.s32 16, 16
      %55 = vsyncadd [#allocation6], %s54
      %s57 = sshll.u32 [#allocation7], 4
      %s58 = int_to_ptr.vmem [resolvable:$true] %s57
      %60 = dma.hbm_to_vmem [thread:$0]  %s4, 16, %s58, [#allocation6]
    $region21: #{tpu_custom_call.1} parent=1 // pred_fallthru
      _
    // Predicated region
    $region22: #{tpu_custom_call.1} parent=1 // pred_check
      _
    $region23: #{tpu_custom_call.1} parent=1 // pred_check_branch
      %62 = sbr.rel (0) target = $region25
    $region24: #{tpu_custom_call.1} parent=1 // pred_region
      %s64 = ssub.s32 16, 16
      %65 = vsyncadd [#allocation9], %s64
      %s67 = sshll.u32 [#allocation8], 4
      %s68 = int_to_ptr.vmem [resolvable:$true] %s67
      %70 = dma.hbm_to_vmem [thread:$0]  %s5, 16, %s68, [#allocation9]
    $region25: #{tpu_custom_call.1} parent=1 // pred_fallthru
      _
    // Predicated region
    $region26: #{tpu_custom_call.1} parent=1 // pred_check
      _
    $region27: #{tpu_custom_call.1} parent=1 // pred_check_branch
      %72 = sbr.rel (0) target = $region29
    $region28: #{tpu_custom_call.1} parent=1 // pred_region
      %s74 = ssub.s32 16, 16
      %75 = vsyncadd [#allocation9], %s74
      %s77 = sshll.u32 [#allocation10], 4
      %s78 = int_to_ptr.vmem [resolvable:$true] %s77
      %80 = dma.hbm_to_vmem [thread:$0]  %s6, 16, %s78, [#allocation9]
    $region29: #{tpu_custom_call.1} parent=1 // pred_fallthru
      _
    // Predicated region
    $region30: #{tpu_custom_call.1} parent=1 // pred_check
      _
    $region31: #{tpu_custom_call.1} parent=1 // pred_check_branch
      %82 = sbr.rel (0) target = $region33
    $region32: #{tpu_custom_call.1} parent=1 // pred_region
      %s84 = ssub.s32 256, 256
      %85 = vsyncadd [#allocation12], %s84
      %s86 = sshll.u32 [#allocation11], 4
      %s87 = int_to_ptr.vmem [resolvable:$true] %s86
      %92 = dma.hbm_to_vmem [thread:$0]  %s7, 256, %s87, [#allocation12], 64, 64, 4
    $region33: #{tpu_custom_call.1} parent=1 // pred_fallthru
      _
    // Predicated region
    $region34: #{tpu_custom_call.1} parent=1 // pred_check
      _
    $region35: #{tpu_custom_call.1} parent=1 // pred_check_branch
      %94 = sbr.rel (0) target = $region37
    $region36: #{tpu_custom_call.1} parent=1 // pred_region
      %s96 = ssub.s32 16, 16
      %97 = vsyncadd [#allocation12], %s96
      %s99 = sshll.u32 [#allocation13], 4
      %s100 = int_to_ptr.vmem [resolvable:$true] %s99
      %102 = dma.hbm_to_vmem [thread:$0]  %s8, 16, %s100, [#allocation12]
    $region37: #{tpu_custom_call.1} parent=1 // pred_fallthru
      _
    // Predicated region
    $region38: #{tpu_custom_call.1} parent=1 // pred_check
      _
    $region39: #{tpu_custom_call.1} parent=1 // pred_check_branch
      %104 = sbr.rel (0) target = $region41
    $region40: #{tpu_custom_call.1} parent=1 // pred_region
      _
    $region41: #{tpu_custom_call.1} parent=1 // pred_fallthru
      _
    // Predicated region
    $region42: #{tpu_custom_call.1} parent=1 // pred_check
      _
    $region43: #{tpu_custom_call.1} parent=1 // pred_check_branch
      %106 = sbr.rel (0) target = $region45
    $region44: #{tpu_custom_call.1} parent=1 // pred_region
      _
    $region45: #{tpu_custom_call.1} parent=1 // pred_fallthru
      _
    // Predicated region
    $region46: #{tpu_custom_call.1} parent=1 // pred_check
      _
    $region47: #{tpu_custom_call.1} parent=1 // pred_check_branch
      %108 = sbr.rel (0) target = $region49
    $region48: #{tpu_custom_call.1} parent=1 // pred_region
      _
    $region49: #{tpu_custom_call.1} parent=1 // pred_fallthru
      _
    // Predicated region
    $region50: #{tpu_custom_call.1} parent=1 // pred_check
      _
    $region51: #{tpu_custom_call.1} parent=1 // pred_check_branch
      %110 = sbr.rel (0) target = $region53
    $region52: #{tpu_custom_call.1} parent=1 // pred_region
      _
    $region53: #{tpu_custom_call.1} parent=1 // pred_fallthru
      _
    // Predicated region
    $region54: #{tpu_custom_call.1} parent=1 // pred_check
      _
    $region55: #{tpu_custom_call.1} parent=1 // pred_check_branch
      %112 = sbr.rel (0) target = $region57
    $region56: #{tpu_custom_call.1} parent=1 // pred_region
      %113 = dma.done [#allocation3], 64
    $region57: #{tpu_custom_call.1} parent=1 // pred_fallthru
      _
    // Predicated region
    $region58: #{tpu_custom_call.1} parent=1 // pred_check
      _
    $region59: #{tpu_custom_call.1} parent=1 // pred_check_branch
      %115 = sbr.rel (0) target = $region61
    $region60: #{tpu_custom_call.1} parent=1 // pred_region
      %116 = dma.done [#allocation6], 256
    $region61: #{tpu_custom_call.1} parent=1 // pred_fallthru
      _
    // Predicated region
    $region62: #{tpu_custom_call.1} parent=1 // pred_check
      _
    $region63: #{tpu_custom_call.1} parent=1 // pred_check_branch
      %118 = sbr.rel (0) target = $region65
    $region64: #{tpu_custom_call.1} parent=1 // pred_region
      %119 = dma.done [#allocation6], 16
    $region65: #{tpu_custom_call.1} parent=1 // pred_fallthru
      _
    // Predicated region
    $region66: #{tpu_custom_call.1} parent=1 // pred_check
      _
    $region67: #{tpu_custom_call.1} parent=1 // pred_check_branch
      %121 = sbr.rel (0) target = $region69
    $region68: #{tpu_custom_call.1} parent=1 // pred_region
      %122 = dma.done [#allocation9], 16
    $region69: #{tpu_custom_call.1} parent=1 // pred_fallthru
      _
    // Predicated region
    $region70: #{tpu_custom_call.1} parent=1 // pred_check
      _
    $region71: #{tpu_custom_call.1} parent=1 // pred_check_branch
      %124 = sbr.rel (0) target = $region73
    $region72: #{tpu_custom_call.1} parent=1 // pred_region
      %125 = dma.done [#allocation9], 16
    $region73: #{tpu_custom_call.1} parent=1 // pred_fallthru
      _
    // Predicated region
    $region74: #{tpu_custom_call.1} parent=1 // pred_check
      _
    $region75: #{tpu_custom_call.1} parent=1 // pred_check_branch
      %127 = sbr.rel (0) target = $region77
    $region76: #{tpu_custom_call.1} parent=1 // pred_region
      %128 = dma.done [#allocation12], 256
    $region77: #{tpu_custom_call.1} parent=1 // pred_fallthru
      _
    // Predicated region
    $region78: #{tpu_custom_call.1} parent=1 // pred_check
      _
    $region79: #{tpu_custom_call.1} parent=1 // pred_check_branch
      %130 = sbr.rel (0) target = $region81
    $region80: #{tpu_custom_call.1} parent=1 // pred_region
      %131 = dma.done [#allocation12], 16
    $region81: #{tpu_custom_call.1} parent=1 // pred_fallthru
      _
    %v133 = vld [vmem:[%s0] sm:$0xff]
    %v134 = vld [vmem:[%s0 + $0x8] sm:$0xff]
    %v135 = vld [vmem:[%s0 + $0x10] sm:$0xff]
    %v136 = vld [vmem:[%s0 + $0x18] sm:$0xff]
    %v137 = vpack.c.bf16 %v134, %v133
    %v138 = vpack.c.bf16 %v136, %v135
    %v139 = vld [vmem:[%s2] sm:$0xf]
    %v140 = vld [vmem:[%s2 + $0x4] sm:$0xf]
    %v141 = vld [vmem:[%s2 + $0x8] sm:$0xf]
    %v142 = vld [vmem:[%s2 + $0xc] sm:$0xf]
    %v147 = vunpack.c.l.b16 %v139
    %v148 = vunpack.c.l.b16 %v140
    %v149 = vunpack.c.l.b16 %v141
    %v150 = vunpack.c.l.b16 %v142
    %v151 = vpack.c.b16 %v148, %v147
    %v152 = vpack.c.b16 %v150, %v149
    %vm155 = vcmask 261120
    %v157 = vsel %vm155, %v137, 0
    %v160 = vsel %vm155, %v138, 0
    %162 = vmatprep.subr.bf16.mxu0 0
    %163 = vmatpush1.bf16.msra.mxu0 0
    %164 = vmatprep.subr.bf16.mxu0 0
    %165 = vmatpush1.bf16.msra.mxu0 0
    %166 = vmatprep.subr.bf16.mxu0 0
    %167 = vmatpush1.bf16.msra.mxu0 0
    %168 = vmatprep.subr.bf16.mxu0 0
    %169 = vmatpush1.bf16.msra.mxu0 0
    %170 = vmatprep.subr.bf16.mxu0 0
    %171 = vmatpush1.bf16.msra.mxu0 0
    %172 = vmatprep.subr.bf16.mxu0 0
    %173 = vmatpush1.bf16.msra.mxu0 0
    %174 = vmatprep.subr.bf16.mxu0 0
    %175 = vmatpush1.bf16.msra.mxu0 %v152
    %176 = vmatprep.subr.bf16.mxu0 0
    %177 = vmatpush1.bf16.msra.mxu0 %v151
    %178 = vmatprep.subr.bf16.mxu0 0
    %179 = vmatpush2.bf16.msra.mxu0 0
    %180 = vmatprep.subr.bf16.mxu0 0
    %181 = vmatpush2.bf16.msra.mxu0 0
    %182 = vmatprep.subr.bf16.mxu0 0
    %183 = vmatpush2.bf16.msra.mxu0 0
    %184 = vmatprep.subr.bf16.mxu0 0
    %185 = vmatpush2.bf16.msra.mxu0 0
    %186 = vmatprep.subr.bf16.mxu0 0
    %187 = vmatpush2.bf16.msra.mxu0 0
    %188 = vmatprep.subr.bf16.mxu0 0
    %189 = vmatpush2.bf16.msra.mxu0 0
    %190 = vmatprep.subr.bf16.mxu0 0
    %191 = vmatpush2.bf16.msra.mxu0 0
    %192 = vmatprep.subr.bf16.mxu0 0
    %193 = vmatpush2.bf16.msra.mxu0 0
    %194 = vmatprep.mubr.bf16.mxu0 0
    %195 = vmatmul.mubr.bf16.gmra.mxu0 %v157
    %v196 = vpop.f32.mrf.mxu0
    %v197 = vadd.f32 0.0, %v196
    %v198 = vpop.f32.mrf.mxu0
    %v199 = vpop.f32.mrf.mxu0
    %v200 = vadd.f32 0.0, %v199
    %v201 = vpop.f32.mrf.mxu0
    %202 = vmatprep.mubr.bf16.mxu0 0
    %203 = vmatmul.mubr.bf16.gmra.mxu0 %v160
    %v204 = vpop.f32.mrf.mxu0
    %v205 = vadd.f32 0.0, %v204
    %v206 = vpop.f32.mrf.mxu0
    %v207 = vpop.f32.mrf.mxu0
    %v208 = vadd.f32 0.0, %v207
    %v209 = vpop.f32.mrf.mxu0
    %210 = vdwg.mxu0
    %v211 = vpack.c.bf16 %v197, %v197
    %v212 = vpack.c.bf16 %v200, %v200
    %v213 = vpack.c.bf16 %v205, %v205
    %v214 = vpack.c.bf16 %v208, %v208
    %v215 = vld [vmem:[#allocation2] sm:$0x1]
    %v216 = vld [vmem:[#allocation2 + $0x1] sm:$0x1]
    %v217 = vld [vmem:[#allocation2 + $0x2] sm:$0x1]
    %v218 = vld [vmem:[#allocation2 + $0x3] sm:$0x1]
    %v223 = vlaneseq
    %v224 = vshrl.u32 %v223, 7
    %v225 = vsub.s32 0, %v224
    %v226 = vrot.slane %v215, %v225
    %v227 = vlaneseq
    %v228 = vshrl.u32 %v227, 7
    %v229 = vsub.s32 0, %v228
    %v230 = vrot.slane %v216, %v229
    %v231 = vlaneseq
    %v232 = vshrl.u32 %v231, 7
    %v233 = vsub.s32 0, %v232
    %v234 = vrot.slane %v217, %v233
    %v235 = vlaneseq
    %v236 = vshrl.u32 %v235, 7
    %v237 = vsub.s32 0, %v236
    %v238 = vrot.slane %v218, %v237
    %244 = vrot.lane.b32.xlu0 %v211, 96
    %v245 = vpop.permute.xlu0 %244
    %v247 = vsel %vm155, %v211, 0
    %v250 = vsel %vm155, %v245, 0
    %252 = vmatprep.subr.bf16.mxu0 0
    %253 = vmatpush1.bf16.xpose.msra.mxu0 0
    %254 = vmatprep.subr.bf16.mxu0 0
    %255 = vmatpush1.bf16.xpose.msra.mxu0 0
    %256 = vmatprep.subr.bf16.mxu0 0
    %257 = vmatpush1.bf16.xpose.msra.mxu0 0
    %258 = vmatprep.subr.bf16.mxu0 0
    %259 = vmatpush1.bf16.xpose.msra.mxu0 0
    %260 = vmatprep.subr.bf16.mxu0 0
    %261 = vmatpush1.bf16.xpose.msra.mxu0 0
    %262 = vmatprep.subr.bf16.mxu0 0
    %263 = vmatpush1.bf16.xpose.msra.mxu0 0
    %264 = vmatprep.subr.bf16.mxu0 0
    %265 = vmatpush1.bf16.xpose.msra.mxu0 0
    %266 = vmatprep.subr.bf16.mxu0 0
    %267 = vmatpush1.bf16.xpose.msra.mxu0 %v250
    %268 = vmatprep.subr.bf16.mxu0 0
    %269 = vmatpush2.bf16.xpose.msra.mxu0 0
    %270 = vmatprep.subr.bf16.mxu0 0
    %271 = vmatpush2.bf16.xpose.msra.mxu0 0
    %272 = vmatprep.subr.bf16.mxu0 0
    %273 = vmatpush2.bf16.xpose.msra.mxu0 0
    %274 = vmatprep.subr.bf16.mxu0 0
    %275 = vmatpush2.bf16.xpose.msra.mxu0 0
    %276 = vmatprep.subr.bf16.mxu0 0
    %277 = vmatpush2.bf16.xpose.msra.mxu0 0
    %278 = vmatprep.subr.bf16.mxu0 0
    %279 = vmatpush2.bf16.xpose.msra.mxu0 0
    %280 = vmatprep.subr.bf16.mxu0 0
    %281 = vmatpush2.bf16.xpose.msra.mxu0 0
    %282 = vmatprep.subr.bf16.mxu0 0
    %283 = vmatpush2.bf16.xpose.msra.mxu0 0
    %284 = vmatprep.mubr.bf16.mxu0 0
    %285 = vmatmul.mubr.bf16.gmra.mxu0 %v247
    %v286 = vpop.f32.mrf.mxu0
    %v287 = vadd.f32 %v226, %v286
    %v288 = vpop.f32.mrf.mxu0
    %v289 = vpop.f32.mrf.mxu0
    %v290 = vpop.f32.mrf.mxu0
    %291 = vdwg.mxu0
    %293 = vrot.lane.b32.xlu0 %v212, 96
    %v294 = vpop.permute.xlu0 %293
    %v296 = vsel %vm155, %v212, 0
    %v299 = vsel %vm155, %v294, 0
    %301 = vmatprep.subr.bf16.mxu0 0
    %302 = vmatpush1.bf16.xpose.msra.mxu0 0
    %303 = vmatprep.subr.bf16.mxu0 0
    %304 = vmatpush1.bf16.xpose.msra.mxu0 0
    %305 = vmatprep.subr.bf16.mxu0 0
    %306 = vmatpush1.bf16.xpose.msra.mxu0 0
    %307 = vmatprep.subr.bf16.mxu0 0
    %308 = vmatpush1.bf16.xpose.msra.mxu0 0
    %309 = vmatprep.subr.bf16.mxu0 0
    %310 = vmatpush1.bf16.xpose.msra.mxu0 0
    %311 = vmatprep.subr.bf16.mxu0 0
    %312 = vmatpush1.bf16.xpose.msra.mxu0 0
    %313 = vmatprep.subr.bf16.mxu0 0
    %314 = vmatpush1.bf16.xpose.msra.mxu0 0
    %315 = vmatprep.subr.bf16.mxu0 0
    %316 = vmatpush1.bf16.xpose.msra.mxu0 %v299
    %317 = vmatprep.subr.bf16.mxu0 0
    %318 = vmatpush2.bf16.xpose.msra.mxu0 0
    %319 = vmatprep.subr.bf16.mxu0 0
    %320 = vmatpush2.bf16.xpose.msra.mxu0 0
    %321 = vmatprep.subr.bf16.mxu0 0
    %322 = vmatpush2.bf16.xpose.msra.mxu0 0
    %323 = vmatprep.subr.bf16.mxu0 0
    %324 = vmatpush2.bf16.xpose.msra.mxu0 0
    %325 = vmatprep.subr.bf16.mxu0 0
    %326 = vmatpush2.bf16.xpose.msra.mxu0 0
    %327 = vmatprep.subr.bf16.mxu0 0
    %328 = vmatpush2.bf16.xpose.msra.mxu0 0
    %329 = vmatprep.subr.bf16.mxu0 0
    %330 = vmatpush2.bf16.xpose.msra.mxu0 0
    %331 = vmatprep.subr.bf16.mxu0 0
    %332 = vmatpush2.bf16.xpose.msra.mxu0 0
    %333 = vmatprep.mubr.bf16.mxu0 0
    %334 = vmatmul.mubr.bf16.gmra.mxu0 %v296
    %v335 = vpop.f32.mrf.mxu0
    %v336 = vadd.f32 %v230, %v335
    %v337 = vpop.f32.mrf.mxu0
    %v338 = vpop.f32.mrf.mxu0
    %v339 = vpop.f32.mrf.mxu0
    %340 = vdwg.mxu0
    %342 = vrot.lane.b32.xlu0 %v213, 96
    %v343 = vpop.permute.xlu0 %342
    %v345 = vsel %vm155, %v213, 0
    %v348 = vsel %vm155, %v343, 0
    %350 = vmatprep.subr.bf16.mxu0 0
    %351 = vmatpush1.bf16.xpose.msra.mxu0 0
    %352 = vmatprep.subr.bf16.mxu0 0
    %353 = vmatpush1.bf16.xpose.msra.mxu0 0
    %354 = vmatprep.subr.bf16.mxu0 0
    %355 = vmatpush1.bf16.xpose.msra.mxu0 0
    %356 = vmatprep.subr.bf16.mxu0 0
    %357 = vmatpush1.bf16.xpose.msra.mxu0 0
    %358 = vmatprep.subr.bf16.mxu0 0
    %359 = vmatpush1.bf16.xpose.msra.mxu0 0
    %360 = vmatprep.subr.bf16.mxu0 0
    %361 = vmatpush1.bf16.xpose.msra.mxu0 0
    %362 = vmatprep.subr.bf16.mxu0 0
    %363 = vmatpush1.bf16.xpose.msra.mxu0 0
    %364 = vmatprep.subr.bf16.mxu0 0
    %365 = vmatpush1.bf16.xpose.msra.mxu0 %v348
    %366 = vmatprep.subr.bf16.mxu0 0
    %367 = vmatpush2.bf16.xpose.msra.mxu0 0
    %368 = vmatprep.subr.bf16.mxu0 0
    %369 = vmatpush2.bf16.xpose.msra.mxu0 0
    %370 = vmatprep.subr.bf16.mxu0 0
    %371 = vmatpush2.bf16.xpose.msra.mxu0 0
    %372 = vmatprep.subr.bf16.mxu0 0
    %373 = vmatpush2.bf16.xpose.msra.mxu0 0
    %374 = vmatprep.subr.bf16.mxu0 0
    %375 = vmatpush2.bf16.xpose.msra.mxu0 0
    %376 = vmatprep.subr.bf16.mxu0 0
    %377 = vmatpush2.bf16.xpose.msra.mxu0 0
    %378 = vmatprep.subr.bf16.mxu0 0
    %379 = vmatpush2.bf16.xpose.msra.mxu0 0
    %380 = vmatprep.subr.bf16.mxu0 0
    %381 = vmatpush2.bf16.xpose.msra.mxu0 0
    %382 = vmatprep.mubr.bf16.mxu0 0
    %383 = vmatmul.mubr.bf16.gmra.mxu0 %v345
    %v384 = vpop.f32.mrf.mxu0
    %v385 = vadd.f32 %v234, %v384
    %v386 = vpop.f32.mrf.mxu0
    %v387 = vpop.f32.mrf.mxu0
    %v388 = vpop.f32.mrf.mxu0
    %389 = vdwg.mxu0
    %391 = vrot.lane.b32.xlu0 %v214, 96
    %v392 = vpop.permute.xlu0 %391
    %v394 = vsel %vm155, %v214, 0
    %v397 = vsel %vm155, %v392, 0
    %399 = vmatprep.subr.bf16.mxu0 0
    %400 = vmatpush1.bf16.xpose.msra.mxu0 0
    %401 = vmatprep.subr.bf16.mxu0 0
    %402 = vmatpush1.bf16.xpose.msra.mxu0 0
    %403 = vmatprep.subr.bf16.mxu0 0
    %404 = vmatpush1.bf16.xpose.msra.mxu0 0
    %405 = vmatprep.subr.bf16.mxu0 0
    %406 = vmatpush1.bf16.xpose.msra.mxu0 0
    %407 = vmatprep.subr.bf16.mxu0 0
    %408 = vmatpush1.bf16.xpose.msra.mxu0 0
    %409 = vmatprep.subr.bf16.mxu0 0
    %410 = vmatpush1.bf16.xpose.msra.mxu0 0
    %411 = vmatprep.subr.bf16.mxu0 0
    %412 = vmatpush1.bf16.xpose.msra.mxu0 0
    %413 = vmatprep.subr.bf16.mxu0 0
    %414 = vmatpush1.bf16.xpose.msra.mxu0 %v397
    %415 = vmatprep.subr.bf16.mxu0 0
    %416 = vmatpush2.bf16.xpose.msra.mxu0 0
    %417 = vmatprep.subr.bf16.mxu0 0
    %418 = vmatpush2.bf16.xpose.msra.mxu0 0
    %419 = vmatprep.subr.bf16.mxu0 0
    %420 = vmatpush2.bf16.xpose.msra.mxu0 0
    %421 = vmatprep.subr.bf16.mxu0 0
    %422 = vmatpush2.bf16.xpose.msra.mxu0 0
    %423 = vmatprep.subr.bf16.mxu0 0
    %424 = vmatpush2.bf16.xpose.msra.mxu0 0
    %425 = vmatprep.subr.bf16.mxu0 0
    %426 = vmatpush2.bf16.xpose.msra.mxu0 0
    %427 = vmatprep.subr.bf16.mxu0 0
    %428 = vmatpush2.bf16.xpose.msra.mxu0 0
    %429 = vmatprep.subr.bf16.mxu0 0
    %430 = vmatpush2.bf16.xpose.msra.mxu0 0
    %431 = vmatprep.mubr.bf16.mxu0 0
    %432 = vmatmul.mubr.bf16.gmra.mxu0 %v394
    %v433 = vpop.f32.mrf.mxu0
    %v434 = vadd.f32 %v238, %v433
    %v435 = vpop.f32.mrf.mxu0
    %v436 = vpop.f32.mrf.mxu0
    %v437 = vpop.f32.mrf.mxu0
    %438 = vdwg.mxu0
    %vm439 = vcmask 64512
    %v440 = vsel %vm439, %v287, -inf
    %441 = vmax.xlane.f32.xlu0 %v440
    %v442 = vpop.xlane.xlu0 %441
    %v443 = vsel %vm439, %v336, -inf
    %444 = vmax.xlane.f32.xlu0 %v443
    %v445 = vpop.xlane.xlu0 %444
    %v446 = vsel %vm439, %v385, -inf
    %447 = vmax.xlane.f32.xlu0 %v446
    %v448 = vpop.xlane.xlu0 %447
    %v449 = vsel %vm439, %v434, -inf
    %450 = vmax.xlane.f32.xlu0 %v449
    %v451 = vpop.xlane.xlu0 %450
    %v452 = vsub.f32 %v287, %v442
    %v453 = vsub.f32 %v336, %v445
    %v454 = vsub.f32 %v385, %v448
    %v455 = vsub.f32 %v434, %v451
    %v456 = vmul.f32 %v452, 1.442695
    %v457 = vpow.pop %v456
    %v458 = vmul.f32 %v453, 1.442695
    %v459 = vpow.pop %v458
    %v460 = vmul.f32 %v454, 1.442695
    %v461 = vpow.pop %v460
    %v462 = vmul.f32 %v455, 1.442695
    %v463 = vpow.pop %v462
    %v464 = vsel %vm439, %v457, 0.0
    %465 = vadd.xlane.f32.xlu0 %v464
    %v466 = vpop.xlane.xlu0 %465
    %v467 = vsel %vm439, %v459, 0.0
    %468 = vadd.xlane.f32.xlu0 %v467
    %v469 = vpop.xlane.xlu0 %468
    %v470 = vsel %vm439, %v461, 0.0
    %471 = vadd.xlane.f32.xlu0 %v470
    %v472 = vpop.xlane.xlu0 %471
    %v473 = vsel %vm439, %v463, 0.0
    %474 = vadd.xlane.f32.xlu0 %v473
    %v475 = vpop.xlane.xlu0 %474
    %v476 = vrcp.pop %v466
    %v477 = vrcp.pop %v469
    %v478 = vrcp.pop %v472
    %v479 = vrcp.pop %v475
    %v480 = vmul.f32 %v457, %v476
    %v481 = vmul.f32 %v459, %v477
    %v482 = vmul.f32 %v461, %v478
    %v483 = vmul.f32 %v463, %v479
    %v484 = vpack.c.bf16 %v480, %v480
    %v485 = vpack.c.bf16 %v481, %v481
    %v486 = vpack.c.bf16 %v482, %v482
    %v487 = vpack.c.bf16 %v483, %v483
    %488 = vrot.lane.b32.xlu0 %v211, 64
    %v489 = vpop.permute.xlu0 %488
    %v491 = vsel %vm439, %v484, 0
    %vm493 = vcmask 1043456
    %v495 = vsel %vm493, %v489, 0
    %497 = vmatprep.subr.bf16.mxu0 0
    %498 = vmatpush1.bf16.msra.mxu0 0
    %499 = vmatprep.subr.bf16.mxu0 0
    %500 = vmatpush1.bf16.msra.mxu0 0
    %501 = vmatprep.subr.bf16.mxu0 0
    %502 = vmatpush1.bf16.msra.mxu0 0
    %503 = vmatprep.subr.bf16.mxu0 0
    %504 = vmatpush1.bf16.msra.mxu0 0
    %505 = vmatprep.subr.bf16.mxu0 0
    %506 = vmatpush1.bf16.msra.mxu0 0
    %507 = vmatprep.subr.bf16.mxu0 0
    %508 = vmatpush1.bf16.msra.mxu0 0
    %509 = vmatprep.subr.bf16.mxu0 0
    %510 = vmatpush1.bf16.msra.mxu0 0
    %511 = vmatprep.subr.bf16.mxu0 0
    %512 = vmatpush1.bf16.msra.mxu0 %v495
    %513 = vmatprep.subr.bf16.mxu0 0
    %514 = vmatpush2.bf16.msra.mxu0 0
    %515 = vmatprep.subr.bf16.mxu0 0
    %516 = vmatpush2.bf16.msra.mxu0 0
    %517 = vmatprep.subr.bf16.mxu0 0
    %518 = vmatpush2.bf16.msra.mxu0 0
    %519 = vmatprep.subr.bf16.mxu0 0
    %520 = vmatpush2.bf16.msra.mxu0 0
    %521 = vmatprep.subr.bf16.mxu0 0
    %522 = vmatpush2.bf16.msra.mxu0 0
    %523 = vmatprep.subr.bf16.mxu0 0
    %524 = vmatpush2.bf16.msra.mxu0 0
    %525 = vmatprep.subr.bf16.mxu0 0
    %526 = vmatpush2.bf16.msra.mxu0 0
    %527 = vmatprep.subr.bf16.mxu0 0
    %528 = vmatpush2.bf16.msra.mxu0 0
    %529 = vmatprep.mubr.bf16.mxu0 0
    %530 = vmatmul.mubr.bf16.gmra.mxu0 %v491
    %v531 = vpop.f32.mrf.mxu0
    %v532 = vadd.f32 0.0, %v531
    %v533 = vpop.f32.mrf.mxu0
    %v534 = vpop.f32.mrf.mxu0
    %v535 = vpop.f32.mrf.mxu0
    %536 = vdwg.mxu0
    %537 = vrot.lane.b32.xlu0 %v212, 64
    %v538 = vpop.permute.xlu0 %537
    %v540 = vsel %vm439, %v485, 0
    %v543 = vsel %vm493, %v538, 0
    %545 = vmatprep.subr.bf16.mxu0 0
    %546 = vmatpush1.bf16.msra.mxu0 0
    %547 = vmatprep.subr.bf16.mxu0 0
    %548 = vmatpush1.bf16.msra.mxu0 0
    %549 = vmatprep.subr.bf16.mxu0 0
    %550 = vmatpush1.bf16.msra.mxu0 0
    %551 = vmatprep.subr.bf16.mxu0 0
    %552 = vmatpush1.bf16.msra.mxu0 0
    %553 = vmatprep.subr.bf16.mxu0 0
    %554 = vmatpush1.bf16.msra.mxu0 0
    %555 = vmatprep.subr.bf16.mxu0 0
    %556 = vmatpush1.bf16.msra.mxu0 0
    %557 = vmatprep.subr.bf16.mxu0 0
    %558 = vmatpush1.bf16.msra.mxu0 0
    %559 = vmatprep.subr.bf16.mxu0 0
    %560 = vmatpush1.bf16.msra.mxu0 %v543
    %561 = vmatprep.subr.bf16.mxu0 0
    %562 = vmatpush2.bf16.msra.mxu0 0
    %563 = vmatprep.subr.bf16.mxu0 0
    %564 = vmatpush2.bf16.msra.mxu0 0
    %565 = vmatprep.subr.bf16.mxu0 0
    %566 = vmatpush2.bf16.msra.mxu0 0
    %567 = vmatprep.subr.bf16.mxu0 0
    %568 = vmatpush2.bf16.msra.mxu0 0
    %569 = vmatprep.subr.bf16.mxu0 0
    %570 = vmatpush2.bf16.msra.mxu0 0
    %571 = vmatprep.subr.bf16.mxu0 0
    %572 = vmatpush2.bf16.msra.mxu0 0
    %573 = vmatprep.subr.bf16.mxu0 0
    %574 = vmatpush2.bf16.msra.mxu0 0
    %575 = vmatprep.subr.bf16.mxu0 0
    %576 = vmatpush2.bf16.msra.mxu0 0
    %577 = vmatprep.mubr.bf16.mxu0 0
    %578 = vmatmul.mubr.bf16.gmra.mxu0 %v540
    %v579 = vpop.f32.mrf.mxu0
    %v580 = vadd.f32 0.0, %v579
    %v581 = vpop.f32.mrf.mxu0
    %v582 = vpop.f32.mrf.mxu0
    %v583 = vpop.f32.mrf.mxu0
    %584 = vdwg.mxu0
    %585 = vrot.lane.b32.xlu0 %v213, 64
    %v586 = vpop.permute.xlu0 %585
    %v588 = vsel %vm439, %v486, 0
    %v591 = vsel %vm493, %v586, 0
    %593 = vmatprep.subr.bf16.mxu0 0
    %594 = vmatpush1.bf16.msra.mxu0 0
    %595 = vmatprep.subr.bf16.mxu0 0
    %596 = vmatpush1.bf16.msra.mxu0 0
    %597 = vmatprep.subr.bf16.mxu0 0
    %598 = vmatpush1.bf16.msra.mxu0 0
    %599 = vmatprep.subr.bf16.mxu0 0
    %600 = vmatpush1.bf16.msra.mxu0 0
    %601 = vmatprep.subr.bf16.mxu0 0
    %602 = vmatpush1.bf16.msra.mxu0 0
    %603 = vmatprep.subr.bf16.mxu0 0
    %604 = vmatpush1.bf16.msra.mxu0 0
    %605 = vmatprep.subr.bf16.mxu0 0
    %606 = vmatpush1.bf16.msra.mxu0 0
    %607 = vmatprep.subr.bf16.mxu0 0
    %608 = vmatpush1.bf16.msra.mxu0 %v591
    %609 = vmatprep.subr.bf16.mxu0 0
    %610 = vmatpush2.bf16.msra.mxu0 0
    %611 = vmatprep.subr.bf16.mxu0 0
    %612 = vmatpush2.bf16.msra.mxu0 0
    %613 = vmatprep.subr.bf16.mxu0 0
    %614 = vmatpush2.bf16.msra.mxu0 0
    %615 = vmatprep.subr.bf16.mxu0 0
    %616 = vmatpush2.bf16.msra.mxu0 0
    %617 = vmatprep.subr.bf16.mxu0 0
    %618 = vmatpush2.bf16.msra.mxu0 0
    %619 = vmatprep.subr.bf16.mxu0 0
    %620 = vmatpush2.bf16.msra.mxu0 0
    %621 = vmatprep.subr.bf16.mxu0 0
    %622 = vmatpush2.bf16.msra.mxu0 0
    %623 = vmatprep.subr.bf16.mxu0 0
    %624 = vmatpush2.bf16.msra.mxu0 0
    %625 = vmatprep.mubr.bf16.mxu0 0
    %626 = vmatmul.mubr.bf16.gmra.mxu0 %v588
    %v627 = vpop.f32.mrf.mxu0
    %v628 = vadd.f32 0.0, %v627
    %v629 = vpop.f32.mrf.mxu0
    %v630 = vpop.f32.mrf.mxu0
    %v631 = vpop.f32.mrf.mxu0
    %632 = vdwg.mxu0
    %633 = vrot.lane.b32.xlu0 %v214, 64
    %v634 = vpop.permute.xlu0 %633
    %v636 = vsel %vm439, %v487, 0
    %v639 = vsel %vm493, %v634, 0
    %641 = vmatprep.subr.bf16.mxu0 0
    %642 = vmatpush1.bf16.msra.mxu0 0
    %643 = vmatprep.subr.bf16.mxu0 0
    %644 = vmatpush1.bf16.msra.mxu0 0
    %645 = vmatprep.subr.bf16.mxu0 0
    %646 = vmatpush1.bf16.msra.mxu0 0
    %647 = vmatprep.subr.bf16.mxu0 0
    %648 = vmatpush1.bf16.msra.mxu0 0
    %649 = vmatprep.subr.bf16.mxu0 0
    %650 = vmatpush1.bf16.msra.mxu0 0
    %651 = vmatprep.subr.bf16.mxu0 0
    %652 = vmatpush1.bf16.msra.mxu0 0
    %653 = vmatprep.subr.bf16.mxu0 0
    %654 = vmatpush1.bf16.msra.mxu0 0
    %655 = vmatprep.subr.bf16.mxu0 0
    %656 = vmatpush1.bf16.msra.mxu0 %v639
    %657 = vmatprep.subr.bf16.mxu0 0
    %658 = vmatpush2.bf16.msra.mxu0 0
    %659 = vmatprep.subr.bf16.mxu0 0
    %660 = vmatpush2.bf16.msra.mxu0 0
    %661 = vmatprep.subr.bf16.mxu0 0
    %662 = vmatpush2.bf16.msra.mxu0 0
    %663 = vmatprep.subr.bf16.mxu0 0
    %664 = vmatpush2.bf16.msra.mxu0 0
    %665 = vmatprep.subr.bf16.mxu0 0
    %666 = vmatpush2.bf16.msra.mxu0 0
    %667 = vmatprep.subr.bf16.mxu0 0
    %668 = vmatpush2.bf16.msra.mxu0 0
    %669 = vmatprep.subr.bf16.mxu0 0
    %670 = vmatpush2.bf16.msra.mxu0 0
    %671 = vmatprep.subr.bf16.mxu0 0
    %672 = vmatpush2.bf16.msra.mxu0 0
    %673 = vmatprep.mubr.bf16.mxu0 0
    %674 = vmatmul.mubr.bf16.gmra.mxu0 %v636
    %v675 = vpop.f32.mrf.mxu0
    %v676 = vadd.f32 0.0, %v675
    %v677 = vpop.f32.mrf.mxu0
    %v678 = vpop.f32.mrf.mxu0
    %v679 = vpop.f32.mrf.mxu0
    %680 = vdwg.mxu0
    %v681 = vpack.c.bf16 %v580, %v532
    %v682 = vpack.c.bf16 %v676, %v628
    %v683 = vld [vmem:[#allocation5] sm:$0xf]
    %v684 = vld [vmem:[#allocation5 + $0x4] sm:$0xf]
    %v685 = vld [vmem:[#allocation5 + $0x8] sm:$0xf]
    %v686 = vld [vmem:[#allocation5 + $0xc] sm:$0xf]
    %v687 = vld [vmem:[#allocation7] sm:$0x1]
    %v689 = vlaneseq
    %v690 = vshrl.u32 %v689, 7
    %v691 = vsub.s32 0, %v690
    %v692 = vrot.slane %v687, %v691
    %v698 = vunpack.c.l.b16 %v683
    %v699 = vunpack.c.l.b16 %v684
    %v700 = vunpack.c.l.b16 %v685
    %v701 = vunpack.c.l.b16 %v686
    %v702 = vpack.c.b16 %v699, %v698
    %v703 = vpack.c.b16 %v701, %v700
    %v707 = vsel %vm155, %v681, 0
    %v710 = vsel %vm155, %v682, 0
    %712 = vmatprep.subr.bf16.mxu0 0
    %713 = vmatpush1.bf16.msra.mxu0 0
    %714 = vmatprep.subr.bf16.mxu0 0
    %715 = vmatpush1.bf16.msra.mxu0 0
    %716 = vmatprep.subr.bf16.mxu0 0
    %717 = vmatpush1.bf16.msra.mxu0 0
    %718 = vmatprep.subr.bf16.mxu0 0
    %719 = vmatpush1.bf16.msra.mxu0 0
    %720 = vmatprep.subr.bf16.mxu0 0
    %721 = vmatpush1.bf16.msra.mxu0 0
    %722 = vmatprep.subr.bf16.mxu0 0
    %723 = vmatpush1.bf16.msra.mxu0 0
    %724 = vmatprep.subr.bf16.mxu0 0
    %725 = vmatpush1.bf16.msra.mxu0 %v703
    %726 = vmatprep.subr.bf16.mxu0 0
    %727 = vmatpush1.bf16.msra.mxu0 %v702
    %728 = vmatprep.subr.bf16.mxu0 0
    %729 = vmatpush2.bf16.msra.mxu0 0
    %730 = vmatprep.subr.bf16.mxu0 0
    %731 = vmatpush2.bf16.msra.mxu0 0
    %732 = vmatprep.subr.bf16.mxu0 0
    %733 = vmatpush2.bf16.msra.mxu0 0
    %734 = vmatprep.subr.bf16.mxu0 0
    %735 = vmatpush2.bf16.msra.mxu0 0
    %736 = vmatprep.subr.bf16.mxu0 0
    %737 = vmatpush2.bf16.msra.mxu0 0
    %738 = vmatprep.subr.bf16.mxu0 0
    %739 = vmatpush2.bf16.msra.mxu0 0
    %740 = vmatprep.subr.bf16.mxu0 0
    %741 = vmatpush2.bf16.msra.mxu0 0
    %742 = vmatprep.subr.bf16.mxu0 0
    %743 = vmatpush2.bf16.msra.mxu0 0
    %744 = vmatprep.mubr.bf16.mxu0 0
    %745 = vmatmul.mubr.bf16.gmra.mxu0 %v707
    %v746 = vpop.f32.mrf.mxu0
    %v747 = vadd.f32 %v692, %v746
    %v748 = vpop.f32.mrf.mxu0
    %v749 = vpop.f32.mrf.mxu0
    %v750 = vadd.f32 %v692, %v749
    %v751 = vpop.f32.mrf.mxu0
    %752 = vmatprep.mubr.bf16.mxu0 0
    %753 = vmatmul.mubr.bf16.gmra.mxu0 %v710
    %v754 = vpop.f32.mrf.mxu0
    %v755 = vadd.f32 %v692, %v754
    %v756 = vpop.f32.mrf.mxu0
    %v757 = vpop.f32.mrf.mxu0
    %v758 = vadd.f32 %v692, %v757
    %v759 = vpop.f32.mrf.mxu0
    %760 = vdwg.mxu0
    %v761 = vadd.f32 %v133, %v747
    %v762 = vadd.f32 %v134, %v750
    %v763 = vadd.f32 %v135, %v755
    %v764 = vadd.f32 %v136, %v758
    %v765 = vsel %vm155, %v761, 0.0
    %766 = vadd.xlane.f32.xlu0 %v765
    %v767 = vpop.xlane.xlu0 %766
    %v768 = vsel %vm155, %v762, 0.0
    %769 = vadd.xlane.f32.xlu0 %v768
    %v770 = vpop.xlane.xlu0 %769
    %v771 = vsel %vm155, %v763, 0.0
    %772 = vadd.xlane.f32.xlu0 %v771
    %v773 = vpop.xlane.xlu0 %772
    %v774 = vsel %vm155, %v764, 0.0
    %775 = vadd.xlane.f32.xlu0 %v774
    %v776 = vpop.xlane.xlu0 %775
    %v777 = vrcp.pop 32.0
    %v778 = vmul.f32 %v767, %v777
    %v779 = vmul.f32 %v770, %v777
    %v780 = vmul.f32 %v773, %v777
    %v781 = vmul.f32 %v776, %v777
    %v782 = vsub.f32 %v761, %v778
    %v783 = vsub.f32 %v762, %v779
    %v784 = vsub.f32 %v763, %v780
    %v785 = vsub.f32 %v764, %v781
    %v786 = vmul.f32 %v782, %v782
    %v787 = vmul.f32 %v783, %v783
    %v788 = vmul.f32 %v784, %v784
    %v789 = vmul.f32 %v785, %v785
    %v790 = vsel %vm155, %v786, 0.0
    %791 = vadd.xlane.f32.xlu0 %v790
    %v792 = vpop.xlane.xlu0 %791
    %v793 = vsel %vm155, %v787, 0.0
    %794 = vadd.xlane.f32.xlu0 %v793
    %v795 = vpop.xlane.xlu0 %794
    %v796 = vsel %vm155, %v788, 0.0
    %797 = vadd.xlane.f32.xlu0 %v796
    %v798 = vpop.xlane.xlu0 %797
    %v799 = vsel %vm155, %v789, 0.0
    %800 = vadd.xlane.f32.xlu0 %v799
    %v801 = vpop.xlane.xlu0 %800
    %v802 = vmul.f32 %v792, %v777
    %v803 = vmul.f32 %v795, %v777
    %v804 = vmul.f32 %v798, %v777
    %v805 = vmul.f32 %v801, %v777
    %v806 = vadd.f32 %v802, 1e-05
    %v807 = vadd.f32 %v803, 1e-05
    %v808 = vadd.f32 %v804, 1e-05
    %v809 = vadd.f32 %v805, 1e-05
    %v810 = vrsqrt.pop %v806
    %v811 = vrsqrt.pop %v807
    %v812 = vrsqrt.pop %v808
    %v813 = vrsqrt.pop %v809
    %v814 = vmul.f32 %v782, %v810
    %v815 = vmul.f32 %v783, %v811
    %v816 = vmul.f32 %v784, %v812
    %v817 = vmul.f32 %v785, %v813
    %v818 = vld [vmem:[#allocation8] sm:$0x1]
    %v820 = vlaneseq
    %v821 = vshrl.u32 %v820, 7
    %v822 = vsub.s32 0, %v821
    %v823 = vrot.slane %v818, %v822
    %v825 = vmul.f32 %v814, %v823
    %v826 = vmul.f32 %v815, %v823
    %v827 = vmul.f32 %v816, %v823
    %v828 = vmul.f32 %v817, %v823
    %v829 = vld [vmem:[#allocation10] sm:$0x1]
    %v831 = vlaneseq
    %v832 = vshrl.u32 %v831, 7
    %v833 = vsub.s32 0, %v832
    %v834 = vrot.slane %v829, %v833
    %v836 = vadd.f32 %v825, %v834
    %v837 = vadd.f32 %v826, %v834
    %v838 = vadd.f32 %v827, %v834
    %v839 = vadd.f32 %v828, %v834
    %v840 = vpack.c.bf16 %v837, %v836
    %v841 = vpack.c.bf16 %v839, %v838
    %v842 = vld [vmem:[#allocation11] sm:$0xf]
    %v843 = vld [vmem:[#allocation11 + $0x4] sm:$0xf]
    %v844 = vld [vmem:[#allocation11 + $0x8] sm:$0xf]
    %v845 = vld [vmem:[#allocation11 + $0xc] sm:$0xf]
    %v846 = vld [vmem:[#allocation13] sm:$0x1]
    %v848 = vlaneseq
    %v849 = vshrl.u32 %v848, 7
    %v850 = vsub.s32 0, %v849
    %v851 = vrot.slane %v846, %v850
    %v857 = vunpack.c.l.b16 %v842
    %v858 = vunpack.c.l.b16 %v843
    %v859 = vunpack.c.l.b16 %v844
    %v860 = vunpack.c.l.b16 %v845
    %v861 = vpack.c.b16 %v858, %v857
    %v862 = vpack.c.b16 %v860, %v859
    %v866 = vsel %vm155, %v840, 0
    %v869 = vsel %vm155, %v841, 0
    %871 = vmatprep.subr.bf16.mxu0 0
    %872 = vmatpush1.bf16.msra.mxu0 0
    %873 = vmatprep.subr.bf16.mxu0 0
    %874 = vmatpush1.bf16.msra.mxu0 0
    %875 = vmatprep.subr.bf16.mxu0 0
    %876 = vmatpush1.bf16.msra.mxu0 0
    %877 = vmatprep.subr.bf16.mxu0 0
    %878 = vmatpush1.bf16.msra.mxu0 0
    %879 = vmatprep.subr.bf16.mxu0 0
    %880 = vmatpush1.bf16.msra.mxu0 0
    %881 = vmatprep.subr.bf16.mxu0 0
    %882 = vmatpush1.bf16.msra.mxu0 0
    %883 = vmatprep.subr.bf16.mxu0 0
    %884 = vmatpush1.bf16.msra.mxu0 %v862
    %885 = vmatprep.subr.bf16.mxu0 0
    %886 = vmatpush1.bf16.msra.mxu0 %v861
    %887 = vmatprep.subr.bf16.mxu0 0
    %888 = vmatpush2.bf16.msra.mxu0 0
    %889 = vmatprep.subr.bf16.mxu0 0
    %890 = vmatpush2.bf16.msra.mxu0 0
    %891 = vmatprep.subr.bf16.mxu0 0
    %892 = vmatpush2.bf16.msra.mxu0 0
    %893 = vmatprep.subr.bf16.mxu0 0
    %894 = vmatpush2.bf16.msra.mxu0 0
    %895 = vmatprep.subr.bf16.mxu0 0
    %896 = vmatpush2.bf16.msra.mxu0 0
    %897 = vmatprep.subr.bf16.mxu0 0
    %898 = vmatpush2.bf16.msra.mxu0 0
    %899 = vmatprep.subr.bf16.mxu0 0
    %900 = vmatpush2.bf16.msra.mxu0 0
    %901 = vmatprep.subr.bf16.mxu0 0
    %902 = vmatpush2.bf16.msra.mxu0 0
    %903 = vmatprep.mubr.bf16.mxu0 0
    %904 = vmatmul.mubr.bf16.gmra.mxu0 %v866
    %v905 = vpop.f32.mrf.mxu0
    %v906 = vadd.f32 %v851, %v905
    %v907 = vpop.f32.mrf.mxu0
    %v908 = vpop.f32.mrf.mxu0
    %v909 = vadd.f32 %v851, %v908
    %v910 = vpop.f32.mrf.mxu0
    %911 = vmatprep.mubr.bf16.mxu0 0
    %912 = vmatmul.mubr.bf16.gmra.mxu0 %v869
    %v913 = vpop.f32.mrf.mxu0
    %v914 = vadd.f32 %v851, %v913
    %v915 = vpop.f32.mrf.mxu0
    %v916 = vpop.f32.mrf.mxu0
    %v917 = vadd.f32 %v851, %v916
    %v918 = vpop.f32.mrf.mxu0
    %919 = vdwg.mxu0
    %v920 = vmax.f32 %v906, 0.0
    %v921 = vmax.f32 %v909, 0.0
    %v922 = vmax.f32 %v914, 0.0
    %v923 = vmax.f32 %v917, 0.0
    %v924 = vpack.c.bf16 %v921, %v920
    %v925 = vpack.c.bf16 %v923, %v922
    %v926 = vld [vmem:[%s9] sm:$0xf]
    %v927 = vld [vmem:[%s9 + $0x4] sm:$0xf]
    %v928 = vld [vmem:[%s9 + $0x8] sm:$0xf]
    %v929 = vld [vmem:[%s9 + $0xc] sm:$0xf]
    %v930 = vld [vmem:[%s9 + $0x10] sm:$0xf]
    %v931 = vld [vmem:[%s9 + $0x14] sm:$0xf]
    %v932 = vld [vmem:[%s9 + $0x18] sm:$0xf]
    %v933 = vld [vmem:[%s9 + $0x1c] sm:$0xf]
    %v934 = vld [vmem:[%s10] sm:$0x1]
    %v936 = vlaneseq
    %v937 = vshrl.u32 %v936, 7
    %v938 = vsub.s32 0, %v937
    %v939 = vrot.slane %v934, %v938
    %v949 = vunpack.c.l.b16 %v926
    %v950 = vunpack.c.l.b16 %v927
    %v951 = vunpack.c.l.b16 %v928
    %v952 = vunpack.c.l.b16 %v929
    %v953 = vunpack.c.l.b16 %v930
    %v954 = vunpack.c.l.b16 %v931
    %v955 = vunpack.c.l.b16 %v932
    %v956 = vunpack.c.l.b16 %v933
    %v957 = vpack.c.b16 %v950, %v949
    %v958 = vpack.c.b16 %v952, %v951
    %v959 = vpack.c.b16 %v954, %v953
    %v960 = vpack.c.b16 %v956, %v955
    %vm965 = vcmask 523264
    %v967 = vsel %vm965, %v924, 0
    %v970 = vsel %vm965, %v925, 0
    %972 = vmatprep.subr.bf16.mxu0 0
    %973 = vmatpush1.bf16.msra.mxu0 0
    %974 = vmatprep.subr.bf16.mxu0 0
    %975 = vmatpush1.bf16.msra.mxu0 0
    %976 = vmatprep.subr.bf16.mxu0 0
    %977 = vmatpush1.bf16.msra.mxu0 0
    %978 = vmatprep.subr.bf16.mxu0 0
    %979 = vmatpush1.bf16.msra.mxu0 0
    %980 = vmatprep.subr.bf16.mxu0 0
    %981 = vmatpush1.bf16.msra.mxu0 %v960
    %982 = vmatprep.subr.bf16.mxu0 0
    %983 = vmatpush1.bf16.msra.mxu0 %v959
    %984 = vmatprep.subr.bf16.mxu0 0
    %985 = vmatpush1.bf16.msra.mxu0 %v958
    %986 = vmatprep.subr.bf16.mxu0 0
    %987 = vmatpush1.bf16.msra.mxu0 %v957
    %988 = vmatprep.subr.bf16.mxu0 0
    %989 = vmatpush2.bf16.msra.mxu0 0
    %990 = vmatprep.subr.bf16.mxu0 0
    %991 = vmatpush2.bf16.msra.mxu0 0
    %992 = vmatprep.subr.bf16.mxu0 0
    %993 = vmatpush2.bf16.msra.mxu0 0
    %994 = vmatprep.subr.bf16.mxu0 0
    %995 = vmatpush2.bf16.msra.mxu0 0
    %996 = vmatprep.subr.bf16.mxu0 0
    %997 = vmatpush2.bf16.msra.mxu0 0
    %998 = vmatprep.subr.bf16.mxu0 0
    %999 = vmatpush2.bf16.msra.mxu0 0
    %1000 = vmatprep.subr.bf16.mxu0 0
    %1001 = vmatpush2.bf16.msra.mxu0 0
    %1002 = vmatprep.subr.bf16.mxu0 0
    %1003 = vmatpush2.bf16.msra.mxu0 0
    %1004 = vmatprep.mubr.bf16.mxu0 0
    %1005 = vmatmul.mubr.bf16.gmra.mxu0 %v967
    %v1006 = vpop.f32.mrf.mxu0
    %v1007 = vadd.f32 %v939, %v1006
    %v1008 = vpop.f32.mrf.mxu0
    %v1009 = vpop.f32.mrf.mxu0
    %v1010 = vadd.f32 %v939, %v1009
    %v1011 = vpop.f32.mrf.mxu0
    %1012 = vmatprep.mubr.bf16.mxu0 0
    %1013 = vmatmul.mubr.bf16.gmra.mxu0 %v970
    %v1014 = vpop.f32.mrf.mxu0
    %v1015 = vadd.f32 %v939, %v1014
    %v1016 = vpop.f32.mrf.mxu0
    %v1017 = vpop.f32.mrf.mxu0
    %v1018 = vadd.f32 %v939, %v1017
    %v1019 = vpop.f32.mrf.mxu0
    %1020 = vdwg.mxu0
    %v1021 = vadd.f32 %v836, %v1007
    %v1022 = vadd.f32 %v837, %v1010
    %v1023 = vadd.f32 %v838, %v1015
    %v1024 = vadd.f32 %v839, %v1018
    %v1025 = vsel %vm155, %v1021, 0.0
    %1026 = vadd.xlane.f32.xlu0 %v1025
    %v1027 = vpop.xlane.xlu0 %1026
    %v1028 = vsel %vm155, %v1022, 0.0
    %1029 = vadd.xlane.f32.xlu0 %v1028
    %v1030 = vpop.xlane.xlu0 %1029
    %v1031 = vsel %vm155, %v1023, 0.0
    %1032 = vadd.xlane.f32.xlu0 %v1031
    %v1033 = vpop.xlane.xlu0 %1032
    %v1034 = vsel %vm155, %v1024, 0.0
    %1035 = vadd.xlane.f32.xlu0 %v1034
    %v1036 = vpop.xlane.xlu0 %1035
    %v1037 = vmul.f32 %v1027, %v777
    %v1038 = vmul.f32 %v1030, %v777
    %v1039 = vmul.f32 %v1033, %v777
    %v1040 = vmul.f32 %v1036, %v777
    %v1041 = vsub.f32 %v1021, %v1037
    %v1042 = vsub.f32 %v1022, %v1038
    %v1043 = vsub.f32 %v1023, %v1039
    %v1044 = vsub.f32 %v1024, %v1040
    %v1045 = vmul.f32 %v1041, %v1041
    %v1046 = vmul.f32 %v1042, %v1042
    %v1047 = vmul.f32 %v1043, %v1043
    %v1048 = vmul.f32 %v1044, %v1044
    %v1049 = vsel %vm155, %v1045, 0.0
    %1050 = vadd.xlane.f32.xlu0 %v1049
    %v1051 = vpop.xlane.xlu0 %1050
    %v1052 = vsel %vm155, %v1046, 0.0
    %1053 = vadd.xlane.f32.xlu0 %v1052
    %v1054 = vpop.xlane.xlu0 %1053
    %v1055 = vsel %vm155, %v1047, 0.0
    %1056 = vadd.xlane.f32.xlu0 %v1055
    %v1057 = vpop.xlane.xlu0 %1056
    %v1058 = vsel %vm155, %v1048, 0.0
    %1059 = vadd.xlane.f32.xlu0 %v1058
    %v1060 = vpop.xlane.xlu0 %1059
    %v1061 = vmul.f32 %v1051, %v777
    %v1062 = vmul.f32 %v1054, %v777
    %v1063 = vmul.f32 %v1057, %v777
    %v1064 = vmul.f32 %v1060, %v777
    %v1065 = vadd.f32 %v1061, 1e-05
    %v1066 = vadd.f32 %v1062, 1e-05
    %v1067 = vadd.f32 %v1063, 1e-05
    %v1068 = vadd.f32 %v1064, 1e-05
    %v1069 = vrsqrt.pop %v1065
    %v1070 = vrsqrt.pop %v1066
    %v1071 = vrsqrt.pop %v1067
    %v1072 = vrsqrt.pop %v1068
    %v1073 = vmul.f32 %v1041, %v1069
    %v1074 = vmul.f32 %v1042, %v1070
    %v1075 = vmul.f32 %v1043, %v1071
    %v1076 = vmul.f32 %v1044, %v1072
    %v1077 = vld [vmem:[%s11] sm:$0x1]
    %v1079 = vlaneseq
    %v1080 = vshrl.u32 %v1079, 7
    %v1081 = vsub.s32 0, %v1080
    %v1082 = vrot.slane %v1077, %v1081
    %v1084 = vmul.f32 %v1073, %v1082
    %v1085 = vmul.f32 %v1074, %v1082
    %v1086 = vmul.f32 %v1075, %v1082
    %v1087 = vmul.f32 %v1076, %v1082
    %v1088 = vld [vmem:[%s12] sm:$0x1]
    %v1090 = vlaneseq
    %v1091 = vshrl.u32 %v1090, 7
    %v1092 = vsub.s32 0, %v1091
    %v1093 = vrot.slane %v1088, %v1092
    %v1095 = vadd.f32 %v1084, %v1093
    %v1096 = vadd.f32 %v1085, %v1093
    %v1097 = vadd.f32 %v1086, %v1093
    %v1098 = vadd.f32 %v1087, %v1093
    %1099 = vst.msk [vmem:[#allocation14] sm:$0xff] %vm155, %v1095
    %1100 = vst.msk [vmem:[#allocation14 + $0x8] sm:$0xff] %vm155, %v1096
    %1101 = vst.msk [vmem:[#allocation14 + $0x10] sm:$0xff] %vm155, %v1097
    %1102 = vst.msk [vmem:[#allocation14 + $0x18] sm:$0xff] %vm155, %v1098
    // Predicated region
    $region82: #{tpu_custom_call.1} parent=1 // pred_check
      _
    $region83: #{tpu_custom_call.1} parent=1 // pred_check_branch
      %1104 = sbr.rel (0) target = $region85
    $region84: #{tpu_custom_call.1} parent=1 // pred_region
      %s1106 = ssub.s32 512, 512
      %1107 = vsyncadd [#allocation4], %s1106
      %s1108 = sshll.u32 [#allocation14], 4
      %s1109 = int_to_ptr.vmem [resolvable:$true] %s1108
      %1114 = dma.vmem_to_hbm [thread:$0]  %s1109, 512, %s13, [#allocation4], 128, 128, 8
    $region85: #{tpu_custom_call.1} parent=1 // pred_fallthru
      _
    // Predicated region
    $region86: #{tpu_custom_call.1} parent=1 // pred_check
      _
    $region87: #{tpu_custom_call.1} parent=1 // pred_check_branch
      %1116 = sbr.rel (0) target = $region89
    $region88: #{tpu_custom_call.1} parent=1 // pred_region
      %1117 = dma.done [#allocation4], 512
    $region89: #{tpu_custom_call.1} parent=1 // pred_fallthru
      _
    %1118 = vsyncpa [#allocation3], 1
    %1119 = vsyncpa [#allocation6], 1
    %1120 = vsyncpa [#allocation9], 1
    %1121 = vsyncpa [#allocation12], 1
    %1122 = vsyncpa [#allocation4], 1

</llo_original>
